<compile_context>
chip_gen: v7x
topology: tpu7x:2x2x1
jax: 0.10.0
libtpu: 0.0.40
codegen_flags: <defaults>
</compile_context>

<pallas_src>
import jax
import jax.numpy as jnp
import numpy as np
from jax import lax
from jax.experimental import pallas as pl
from jax.experimental.pallas import tpu as pltpu

# Problem constants (from the PyTorch module + its example input x1).
N, C_IN, H_IN, W_IN = 1, 2, 12, 18
C_OUT, K, S = 5, 3, 2
H_OUT = (H_IN - 1) * S + K                  # 25
W_OUT = (W_IN - 1) * S + K                  # 37
CKK = C_IN * K * K                          # 18 im2col rows (contraction dim)
HW = H_OUT * W_OUT                          # 925 lane-dense output columns


def conv_t_sigmoid_kernel(w_ref, b_ref, p_ref, o_ref):
    # w_ref: VMEM f32[C_OUT, CKK]   spatially-flipped kernel, (co) x (ci,kh,kw)
    # b_ref: VMEM f32[C_OUT, 1]     bias column (broadcasts over lanes)
    # p_ref: VMEM f32[CKK, HW]      im2col patches of the dilated+padded input
    # o_ref: VMEM f32[C_OUT, HW]    lane-dense output, column = oh*W_OUT + ow
    acc = jnp.dot(w_ref[...], p_ref[...],
                  preferred_element_type=jnp.float32,
                  precision=lax.Precision.HIGHEST)
    o_ref[...] = jax.nn.sigmoid(acc + b_ref[...])


def conv_transpose_sigmoid(x, w, b):
    """x: (N, C_IN, H_IN, W_IN); w: (C_IN, C_OUT, K, K) [PyTorch layout]; b: (C_OUT,)."""
    x = x.astype(jnp.float32)

    # Zero-insert (stride dilation) + pad by K-1 on each spatial side.
    xd = jnp.zeros((C_IN, (H_IN - 1) * S + 1, (W_IN - 1) * S + 1), jnp.float32)
    xd = xd.at[:, ::S, ::S].set(x[0])
    xp = jnp.pad(xd, ((0, 0), (K - 1, K - 1), (K - 1, K - 1)))      # (C_IN, 27, 39)

    # im2col: 18 shifted views of the padded input, flattened lane-dense.
    views = []
    for ci in range(C_IN):
        for kh in range(K):
            for kw in range(K):
                views.append(xp[ci, kh:kh + H_OUT, kw:kw + W_OUT].reshape(HW))
    patches = jnp.stack(views, axis=0)                              # (18, 925)

    # Spatially flip the kernel; lay out as the matmul LHS (C_OUT, CKK).
    w_mat = jnp.transpose(w[:, :, ::-1, ::-1], (1, 0, 2, 3)).reshape(C_OUT, CKK)
    w_mat = w_mat.astype(jnp.float32)
    b_col = b.astype(jnp.float32).reshape(C_OUT, 1)

    out2d = pl.pallas_call(
        conv_t_sigmoid_kernel,
        out_shape=jax.ShapeDtypeStruct((C_OUT, HW), jnp.float32),
        in_specs=[
            pl.BlockSpec(memory_space=pltpu.MemorySpace.VMEM),      # weights (360 B)
            pl.BlockSpec(memory_space=pltpu.MemorySpace.VMEM),      # bias column
            pl.BlockSpec(memory_space=pltpu.MemorySpace.VMEM),      # im2col patches
        ],
        out_specs=pl.BlockSpec(memory_space=pltpu.MemorySpace.VMEM),
        compiler_params=pltpu.CompilerParams(
            # Let XLA fuse the dilation/pad/im2col producers into the call's inputs.
            allow_input_fusion=[True, True, True]),
    )(w_mat, b_col, patches)

    # Lane-dense (5, 925) -> NCHW (1, 5, 25, 37).
    return out2d.reshape(N, C_OUT, H_OUT, W_OUT)


def reference(x, w, b):
    """Naive ConvTranspose2d + sigmoid straight from the PyTorch definition (exact f32)."""
    out = jnp.zeros((N, C_OUT, H_OUT, W_OUT), jnp.float32)
    for ih in range(H_IN):
        for iw in range(W_IN):
            contrib = (x[:, :, ih, iw][:, :, None, None, None] * w[None]).sum(axis=1)
            out = out.at[:, :, ih * S:ih * S + K, iw * S:iw * S + K].add(contrib)
    return jax.nn.sigmoid(out + b[None, :, None, None])


if __name__ == "__main__":
    key = jax.random.PRNGKey(0)
    kx, kw, kb = jax.random.split(key, 3)
    x1 = jax.random.normal(kx, (N, C_IN, H_IN, W_IN), jnp.float32)
    # Deterministic parameters (ConvTranspose2d weight: (C_IN, C_OUT, K, K), bias: (C_OUT,))
    weight = jax.random.normal(kw, (C_IN, C_OUT, K, K), jnp.float32) * 0.1
    bias = jax.random.normal(kb, (C_OUT,), jnp.float32) * 0.1

    out = conv_transpose_sigmoid(x1, weight, bias)
    out = jax.block_until_ready(out)

    ref = reference(x1, weight, bias)
    assert out.shape == (N, C_OUT, H_OUT, W_OUT), out.shape
    np.testing.assert_allclose(np.asarray(out), np.asarray(ref), rtol=1e-5, atol=1e-5)
    print("KERNEL_OK")
</pallas_src>

<mosaic_0001>
module attributes {stable_mosaic.version = 11 : i64} {
  func.func @conv_t_sigmoid_kernel(%arg0: memref<5x18xf32, #tpu.memory_space<vmem>>, %arg1: memref<5x1xf32, #tpu.memory_space<vmem>>, %arg2: memref<18x925xf32, #tpu.memory_space<vmem>>, %arg3: memref<5x925xf32, #tpu.memory_space<vmem>>) attributes {dimension_semantics = [], scalar_prefetch = 0 : i64, scratch_operands = 0 : i64, tpu.core_type = #tpu.core_type<tc>} {
    %c0 = arith.constant 0 : index
    %c0_0 = arith.constant 0 : index
    %0 = vector.load %arg0[%c0, %c0_0] : memref<5x18xf32, #tpu.memory_space<vmem>>, vector<5x18xf32>
    %c0_1 = arith.constant 0 : index
    %c0_2 = arith.constant 0 : index
    %1 = vector.load %arg2[%c0_1, %c0_2] : memref<18x925xf32, #tpu.memory_space<vmem>>, vector<18x925xf32>
    %cst = arith.constant dense<0.000000e+00> : vector<5x925xf32>
    %2 = tpu.matmul %0, %1, %cst {dimension_numbers = #tpu.dot_dimension_numbers<[1], [0], [0], [1], [0, 0, 1, 1], [], []>, precision = #tpu.contract_precision<fp32>} : vector<5x18xf32>, vector<18x925xf32>, vector<5x925xf32> -> vector<5x925xf32>
    %c0_3 = arith.constant 0 : index
    %c0_4 = arith.constant 0 : index
    %3 = vector.load %arg1[%c0_3, %c0_4] : memref<5x1xf32, #tpu.memory_space<vmem>>, vector<5x1xf32>
    %4 = vector.broadcast %3 : vector<5x1xf32> to vector<5x925xf32>
    %5 = arith.addf %2, %4 : vector<5x925xf32>
    %6 = arith.negf %5 : vector<5x925xf32>
    %7 = math.exp %6 : vector<5x925xf32>
    %cst_5 = arith.constant 1.000000e+00 : f32
    %8 = vector.broadcast %cst_5 : f32 to vector<5x925xf32>
    %9 = arith.addf %8, %7 : vector<5x925xf32>
    %10 = arith.divf %8, %9 : vector<5x925xf32>
    %c0_6 = arith.constant 0 : index
    %c0_7 = arith.constant 0 : index
    %11 = vector.load %arg3[%c0_6, %c0_7] : memref<5x925xf32, #tpu.memory_space<vmem>>, vector<5x925xf32>
    tpu.vector_store %arg3[%c0_6, %c0_7], %10 {strides = array<i32>} : memref<5x925xf32, #tpu.memory_space<vmem>>, vector<5x925xf32>,
    return
  }
}

</mosaic_0001>

<llo_original>
// kernel: tpu_custom_call.1
$region0: #{tpu_custom_call.1}
  #allocation0 [shape = 'u32[]', space=smem, size = 0x4, offset = 0x4, fixed_abs, tag = 'smem constant byte address 0x4 - core index']
  #allocation1 [shape = 'u32[144,128]{1,0:T(1,128)}', space=vmem, size = 0x12000, scoped, tag = 'internal scratch']
  %s0 = inlined_call_operand.vmem [shape: f32[5,18], index: 0, kind: input, shape index: {}]
  %s1 = inlined_call_operand.vmem [shape: f32[5,1], index: 1, kind: input, shape index: {}]
  %s2 = inlined_call_operand.hbm [shape: f32[18,925], index: 2, kind: input, shape index: {}]
  %s3 = inlined_call_operand.hbm [shape: f32[5,925], index: 3, kind: output, shape index: {}]
  %s4 = sld [smem:[#allocation0]]
  $region26: #{tpu_custom_call.1} parent=0
    _
  %s6 = ssub.s32 1, %s4
  %s7 = scalar_select 0, %s6, %s4
  $region1: #{tpu_custom_call.1} parent=0
    #allocation2 [shape = 'u8[98304]{0}', space=vmem, size = 0x18000, scoped, tag = 'input window, operand 2, single buffered']
    #allocation3 [shape = 's32[1]{0}', space=sflag, size = 0x4, scoped, tag = 'scoped memory for tpu_custom_call.1']
    #allocation4 [shape = 's32[1]{0}', space=sflag, size = 0x4, scoped, tag = 'scoped memory for tpu_custom_call.1']
    #allocation5 [shape = 'u8[32768]{0}', space=vmem, size = 0x8000, scoped, tag = 'output window, operand 0, single buffered']
    %8 = vsyncpa [#allocation3], 0
    %9 = vsyncpa [#allocation4], 0
    // Predicated region
    $region2: #{tpu_custom_call.1} parent=1 // pred_check
      _
    $region3: #{tpu_custom_call.1} parent=1 // pred_check_branch
      %11 = sbr.rel (0) target = $region5
    $region4: #{tpu_custom_call.1} parent=1 // pred_region
      _
    $region5: #{tpu_custom_call.1} parent=1 // pred_fallthru
      _
    // Predicated region
    $region6: #{tpu_custom_call.1} parent=1 // pred_check
      _
    $region7: #{tpu_custom_call.1} parent=1 // pred_check_branch
      %13 = sbr.rel (0) target = $region9
    $region8: #{tpu_custom_call.1} parent=1 // pred_region
      _
    $region9: #{tpu_custom_call.1} parent=1 // pred_fallthru
      _
    // Predicated region
    $region10: #{tpu_custom_call.1} parent=1 // pred_check
      _
    $region11: #{tpu_custom_call.1} parent=1 // pred_check_branch
      %15 = sbr.rel (0) target = $region13
    $region12: #{tpu_custom_call.1} parent=1 // pred_region
      %s17 = ssub.s32 3072, 3072
      %18 = vsyncadd [#allocation3], %s17
      %s19 = sshll.u32 [#allocation2], 4
      %s20 = int_to_ptr.vmem [resolvable:$true] %s19
      %25 = dma.hbm_to_vmem [thread:$0]  %s2, 3072, %s20, [#allocation3], 1024, 1024, 64
    $region13: #{tpu_custom_call.1} parent=1 // pred_fallthru
      _
    // Predicated region
    $region14: #{tpu_custom_call.1} parent=1 // pred_check
      _
    $region15: #{tpu_custom_call.1} parent=1 // pred_check_branch
      %27 = sbr.rel (0) target = $region17
    $region16: #{tpu_custom_call.1} parent=1 // pred_region
      %28 = dma.done [#allocation3], 3072
    $region17: #{tpu_custom_call.1} parent=1 // pred_fallthru
      _
    %v29 = vld [vmem:[%s0] sm:$0x1f]
    %v30 = vld [vmem:[#allocation2] sm:$0xff]
    %v31 = vld [vmem:[#allocation2 + $0x8] sm:$0xff]
    %v32 = vld [vmem:[#allocation2 + $0x10] sm:$0xff]
    %v33 = vld [vmem:[#allocation2 + $0x18] sm:$0xff]
    %v34 = vld [vmem:[#allocation2 + $0x20] sm:$0xff]
    %v35 = vld [vmem:[#allocation2 + $0x28] sm:$0xff]
    %v36 = vld [vmem:[#allocation2 + $0x30] sm:$0xff]
    %v37 = vld [vmem:[#allocation2 + $0x38] sm:$0xff]
    %v38 = vld [vmem:[#allocation2 + $0x40] sm:$0xff]
    %v39 = vld [vmem:[#allocation2 + $0x48] sm:$0xff]
    %v40 = vld [vmem:[#allocation2 + $0x50] sm:$0xff]
    %v41 = vld [vmem:[#allocation2 + $0x58] sm:$0xff]
    %v42 = vld [vmem:[#allocation2 + $0x60] sm:$0xff]
    %v43 = vld [vmem:[#allocation2 + $0x68] sm:$0xff]
    %v44 = vld [vmem:[#allocation2 + $0x70] sm:$0xff]
    %v45 = vld [vmem:[#allocation2 + $0x78] sm:$0xff]
    %v46 = vld [vmem:[#allocation2 + $0x80] sm:$0x3]
    %v47 = vld [vmem:[#allocation2 + $0x88] sm:$0x3]
    %v48 = vld [vmem:[#allocation2 + $0x90] sm:$0x3]
    %v49 = vld [vmem:[#allocation2 + $0x98] sm:$0x3]
    %v50 = vld [vmem:[#allocation2 + $0xa0] sm:$0x3]
    %v51 = vld [vmem:[#allocation2 + $0xa8] sm:$0x3]
    %v52 = vld [vmem:[#allocation2 + $0xb0] sm:$0x3]
    %v53 = vld [vmem:[#allocation2 + $0xb8] sm:$0x3]
    %v54 = vld [vmem:[%s1] sm:$0x1f]
    %56 = vset.pattern.permute.xlu0 0
    %57 = vperm.xlu0 %56, %v54
    %v58 = vpop.permute.xlu0 %57
    %vm60 = vcmask 146432
    %v62 = vsel %vm60, %v29, 0
    %vm64 = vcmask 1041408
    %v66 = vsel %vm64, %v46, 0
    %v69 = vsel %vm64, %v47, 0
    %v72 = vsel %vm64, %v48, 0
    %v75 = vsel %vm64, %v49, 0
    %v78 = vsel %vm64, %v50, 0
    %v81 = vsel %vm64, %v51, 0
    %v84 = vsel %vm64, %v52, 0
    %v87 = vsel %vm64, %v53, 0
    %v89 = vand.u32 %v31, 4294901760
    %90 = vmatprep.subr.mxu0 %v89
    %v91 = vand.u32 %v30, 4294901760
    %92 = vmatpush1.msra.mxu0 %v91
    %v93 = vand.u32 %v39, 4294901760
    %94 = vmatprep.subr.mxu0 %v93
    %v95 = vand.u32 %v38, 4294901760
    %96 = vmatpush1.msra.mxu0 %v95
    %v97 = vand.u32 %v69, 4294901760
    %98 = vmatprep.subr.mxu0 %v97
    %v99 = vand.u32 %v66, 4294901760
    %100 = vmatpush1.msra.mxu0 %v99
    %101 = vmatprep.subr.mxu0 0.0
    %102 = vmatpush1.msra.mxu0 0.0
    %103 = vmatprep.subr.mxu0 0.0
    %104 = vmatpush1.msra.mxu0 0.0
    %105 = vmatprep.subr.mxu0 0.0
    %106 = vmatpush1.msra.mxu0 0.0
    %107 = vmatprep.subr.mxu0 0.0
    %108 = vmatpush1.msra.mxu0 0.0
    %109 = vmatprep.subr.mxu0 0.0
    %110 = vmatpush1.msra.mxu0 0.0
    %111 = vmatprep.subr.mxu0 0.0
    %112 = vmatpush1.msra.mxu0 0.0
    %113 = vmatprep.subr.mxu0 0.0
    %114 = vmatpush1.msra.mxu0 0.0
    %115 = vmatprep.subr.mxu0 0.0
    %116 = vmatpush1.msra.mxu0 0.0
    %117 = vmatprep.subr.mxu0 0.0
    %118 = vmatpush1.msra.mxu0 0.0
    %119 = vmatprep.subr.mxu0 0.0
    %120 = vmatpush1.msra.mxu0 0.0
    %121 = vmatprep.subr.mxu0 0.0
    %122 = vmatpush1.msra.mxu0 0.0
    %123 = vmatprep.subr.mxu0 0.0
    %124 = vmatpush1.msra.mxu0 0.0
    %125 = vmatprep.subr.mxu0 0.0
    %126 = vmatpush1.msra.mxu0 0.0
    %127 = vmatprep.subr.mxu0 0.0
    %128 = vmatpush1.msra.mxu0 0.0
    %129 = vmatprep.subr.mxu0 0.0
    %130 = vmatpush1.msra.mxu0 0.0
    %131 = vmatprep.subr.mxu0 0.0
    %132 = vmatpush1.msra.mxu0 0.0
    %133 = vmatprep.subr.mxu0 0.0
    %134 = vmatpush1.msra.mxu0 0.0
    %135 = vmatprep.subr.mxu0 0.0
    %136 = vmatpush1.msra.mxu0 0.0
    %137 = vmatprep.subr.mxu0 0.0
    %138 = vmatpush1.msra.mxu0 0.0
    %139 = vmatprep.subr.mxu0 0.0
    %140 = vmatpush1.msra.mxu0 0.0
    %141 = vmatprep.subr.mxu0 0.0
    %142 = vmatpush1.msra.mxu0 0.0
    %143 = vmatprep.subr.mxu0 0.0
    %144 = vmatpush1.msra.mxu0 0.0
    %145 = vmatprep.subr.mxu0 0.0
    %146 = vmatpush1.msra.mxu0 0.0
    %147 = vmatprep.subr.mxu0 0.0
    %148 = vmatpush1.msra.mxu0 0.0
    %149 = vmatprep.subr.mxu0 0.0
    %150 = vmatpush1.msra.mxu0 0.0
    %151 = vmatprep.subr.mxu0 0.0
    %152 = vmatpush1.msra.mxu0 0.0
    %153 = vmatprep.subr.mxu0 0.0
    %154 = vmatpush1.msra.mxu0 0.0
    %155 = vmatprep.subr.mxu0 0.0
    %156 = vmatpush1.msra.mxu0 0.0
    %157 = vmatprep.subr.mxu0 0.0
    %158 = vmatpush1.msra.mxu0 0.0
    %159 = vmatprep.mubr.f32.mxu0 0.0
    %v160 = vand.u32 %v62, 4294901760
    %v161 = vsub.f32 %v62, %v160
    %v162 = vand.u32 %v161, 4294901760
    %v163 = vsub.f32 %v161, %v162
    %v164 = vand.u32 %v163, 4294901760
    %165 = vmatmul.mubr.f32.gmra.mrb[0].mxu0 %v164
    %v166 = vpop.f32.mrb[0].mxu0
    %v167 = vadd.f32 %v58, %v166
    %v168 = vpop.f32.mrb[0].mxu0
    %v169 = vadd.f32 %v58, %v168
    %170 = vdwg.mxu0
    %v171 = vand.u32 %v31, 4294901760
    %v172 = vsub.f32 %v31, %v171
    %v173 = vand.u32 %v172, 4294901760
    %v174 = vsub.f32 %v172, %v173
    %v175 = vand.u32 %v174, 4294901760
    %176 = vmatprep.subr.mxu0 %v175
    %v177 = vand.u32 %v30, 4294901760
    %v178 = vsub.f32 %v30, %v177
    %v179 = vand.u32 %v178, 4294901760
    %v180 = vsub.f32 %v178, %v179
    %v181 = vand.u32 %v180, 4294901760
    %182 = vmatpush1.msra.mxu0 %v181
    %v183 = vand.u32 %v39, 4294901760
    %v184 = vsub.f32 %v39, %v183
    %v185 = vand.u32 %v184, 4294901760
    %v186 = vsub.f32 %v184, %v185
    %v187 = vand.u32 %v186, 4294901760
    %188 = vmatprep.subr.mxu0 %v187
    %v189 = vand.u32 %v38, 4294901760
    %v190 = vsub.f32 %v38, %v189
    %v191 = vand.u32 %v190, 4294901760
    %v192 = vsub.f32 %v190, %v191
    %v193 = vand.u32 %v192, 4294901760
    %194 = vmatpush1.msra.mxu0 %v193
    %v195 = vand.u32 %v69, 4294901760
    %v196 = vsub.f32 %v69, %v195
    %v197 = vand.u32 %v196, 4294901760
    %v198 = vsub.f32 %v196, %v197
    %v199 = vand.u32 %v198, 4294901760
    %200 = vmatprep.subr.mxu0 %v199
    %v201 = vand.u32 %v66, 4294901760
    %v202 = vsub.f32 %v66, %v201
    %v203 = vand.u32 %v202, 4294901760
    %v204 = vsub.f32 %v202, %v203
    %v205 = vand.u32 %v204, 4294901760
    %206 = vmatpush1.msra.mxu0 %v205
    %207 = vmatprep.subr.mxu0 0.0
    %208 = vmatpush1.msra.mxu0 0.0
    %209 = vmatprep.subr.mxu0 0.0
    %210 = vmatpush1.msra.mxu0 0.0
    %211 = vmatprep.subr.mxu0 0.0
    %212 = vmatpush1.msra.mxu0 0.0
    %213 = vmatprep.subr.mxu0 0.0
    %214 = vmatpush1.msra.mxu0 0.0
    %215 = vmatprep.subr.mxu0 0.0
    %216 = vmatpush1.msra.mxu0 0.0
    %217 = vmatprep.subr.mxu0 0.0
    %218 = vmatpush1.msra.mxu0 0.0
    %219 = vmatprep.subr.mxu0 0.0
    %220 = vmatpush1.msra.mxu0 0.0
    %221 = vmatprep.subr.mxu0 0.0
    %222 = vmatpush1.msra.mxu0 0.0
    %223 = vmatprep.subr.mxu0 0.0
    %224 = vmatpush1.msra.mxu0 0.0
    %225 = vmatprep.subr.mxu0 0.0
    %226 = vmatpush1.msra.mxu0 0.0
    %227 = vmatprep.subr.mxu0 0.0
    %228 = vmatpush1.msra.mxu0 0.0
    %229 = vmatprep.subr.mxu0 0.0
    %230 = vmatpush1.msra.mxu0 0.0
    %231 = vmatprep.subr.mxu0 0.0
    %232 = vmatpush1.msra.mxu0 0.0
    %233 = vmatprep.subr.mxu0 0.0
    %234 = vmatpush1.msra.mxu0 0.0
    %235 = vmatprep.subr.mxu0 0.0
    %236 = vmatpush1.msra.mxu0 0.0
    %237 = vmatprep.subr.mxu0 0.0
    %238 = vmatpush1.msra.mxu0 0.0
    %239 = vmatprep.subr.mxu0 0.0
    %240 = vmatpush1.msra.mxu0 0.0
    %241 = vmatprep.subr.mxu0 0.0
    %242 = vmatpush1.msra.mxu0 0.0
    %243 = vmatprep.subr.mxu0 0.0
    %244 = vmatpush1.msra.mxu0 0.0
    %245 = vmatprep.subr.mxu0 0.0
    %246 = vmatpush1.msra.mxu0 0.0
    %247 = vmatprep.subr.mxu0 0.0
    %248 = vmatpush1.msra.mxu0 0.0
    %249 = vmatprep.subr.mxu0 0.0
    %250 = vmatpush1.msra.mxu0 0.0
    %251 = vmatprep.subr.mxu0 0.0
    %252 = vmatpush1.msra.mxu0 0.0
    %253 = vmatprep.subr.mxu0 0.0
    %254 = vmatpush1.msra.mxu0 0.0
    %255 = vmatprep.subr.mxu0 0.0
    %256 = vmatpush1.msra.mxu0 0.0
    %257 = vmatprep.subr.mxu0 0.0
    %258 = vmatpush1.msra.mxu0 0.0
    %259 = vmatprep.subr.mxu0 0.0
    %260 = vmatpush1.msra.mxu0 0.0
    %261 = vmatprep.subr.mxu0 0.0
    %262 = vmatpush1.msra.mxu0 0.0
    %263 = vmatprep.subr.mxu0 0.0
    %264 = vmatpush1.msra.mxu0 0.0
    %265 = vmatprep.mubr.f32.mxu0 0.0
    %v266 = vand.u32 %v62, 4294901760
    %267 = vmatmul.mubr.f32.gmra.mrb[0].mxu0 %v266
    %v268 = vpop.f32.mrb[0].mxu0
    %v269 = vadd.f32 %v167, %v268
    %v270 = vpop.f32.mrb[0].mxu0
    %v271 = vadd.f32 %v169, %v270
    %272 = vdwg.mxu0
    %v273 = vand.u32 %v31, 4294901760
    %v274 = vsub.f32 %v31, %v273
    %275 = vmatprep.subr.mxu0 %v274
    %v276 = vand.u32 %v30, 4294901760
    %v277 = vsub.f32 %v30, %v276
    %278 = vmatpush1.msra.mxu0 %v277
    %v279 = vand.u32 %v39, 4294901760
    %v280 = vsub.f32 %v39, %v279
    %281 = vmatprep.subr.mxu0 %v280
    %v282 = vand.u32 %v38, 4294901760
    %v283 = vsub.f32 %v38, %v282
    %284 = vmatpush1.msra.mxu0 %v283
    %v285 = vand.u32 %v69, 4294901760
    %v286 = vsub.f32 %v69, %v285
    %287 = vmatprep.subr.mxu0 %v286
    %v288 = vand.u32 %v66, 4294901760
    %v289 = vsub.f32 %v66, %v288
    %290 = vmatpush1.msra.mxu0 %v289
    %291 = vmatprep.subr.mxu0 0.0
    %292 = vmatpush1.msra.mxu0 0.0
    %293 = vmatprep.subr.mxu0 0.0
    %294 = vmatpush1.msra.mxu0 0.0
    %295 = vmatprep.subr.mxu0 0.0
    %296 = vmatpush1.msra.mxu0 0.0
    %297 = vmatprep.subr.mxu0 0.0
    %298 = vmatpush1.msra.mxu0 0.0
    %299 = vmatprep.subr.mxu0 0.0
    %300 = vmatpush1.msra.mxu0 0.0
    %301 = vmatprep.subr.mxu0 0.0
    %302 = vmatpush1.msra.mxu0 0.0
    %303 = vmatprep.subr.mxu0 0.0
    %304 = vmatpush1.msra.mxu0 0.0
    %305 = vmatprep.subr.mxu0 0.0
    %306 = vmatpush1.msra.mxu0 0.0
    %307 = vmatprep.subr.mxu0 0.0
    %308 = vmatpush1.msra.mxu0 0.0
    %309 = vmatprep.subr.mxu0 0.0
    %310 = vmatpush1.msra.mxu0 0.0
    %311 = vmatprep.subr.mxu0 0.0
    %312 = vmatpush1.msra.mxu0 0.0
    %313 = vmatprep.subr.mxu0 0.0
    %314 = vmatpush1.msra.mxu0 0.0
    %315 = vmatprep.subr.mxu0 0.0
    %316 = vmatpush1.msra.mxu0 0.0
    %317 = vmatprep.subr.mxu0 0.0
    %318 = vmatpush1.msra.mxu0 0.0
    %319 = vmatprep.subr.mxu0 0.0
    %320 = vmatpush1.msra.mxu0 0.0
    %321 = vmatprep.subr.mxu0 0.0
    %322 = vmatpush1.msra.mxu0 0.0
    %323 = vmatprep.subr.mxu0 0.0
    %324 = vmatpush1.msra.mxu0 0.0
    %325 = vmatprep.subr.mxu0 0.0
    %326 = vmatpush1.msra.mxu0 0.0
    %327 = vmatprep.subr.mxu0 0.0
    %328 = vmatpush1.msra.mxu0 0.0
    %329 = vmatprep.subr.mxu0 0.0
    %330 = vmatpush1.msra.mxu0 0.0
    %331 = vmatprep.subr.mxu0 0.0
    %332 = vmatpush1.msra.mxu0 0.0
    %333 = vmatprep.subr.mxu0 0.0
    %334 = vmatpush1.msra.mxu0 0.0
    %335 = vmatprep.subr.mxu0 0.0
    %336 = vmatpush1.msra.mxu0 0.0
    %337 = vmatprep.subr.mxu0 0.0
    %338 = vmatpush1.msra.mxu0 0.0
    %339 = vmatprep.subr.mxu0 0.0
    %340 = vmatpush1.msra.mxu0 0.0
    %341 = vmatprep.subr.mxu0 0.0
    %342 = vmatpush1.msra.mxu0 0.0
    %343 = vmatprep.subr.mxu0 0.0
    %344 = vmatpush1.msra.mxu0 0.0
    %345 = vmatprep.subr.mxu0 0.0
    %346 = vmatpush1.msra.mxu0 0.0
    %347 = vmatprep.subr.mxu0 0.0
    %348 = vmatpush1.msra.mxu0 0.0
    %349 = vmatprep.mubr.f32.mxu0 0.0
    %v350 = vand.u32 %v62, 4294901760
    %v351 = vsub.f32 %v62, %v350
    %352 = vmatmul.mubr.f32.gmra.mrb[0].mxu0 %v351
    %v353 = vpop.f32.mrb[0].mxu0
    %v354 = vadd.f32 %v269, %v353
    %v355 = vpop.f32.mrb[0].mxu0
    %v356 = vadd.f32 %v271, %v355
    %357 = vdwg.mxu0
    %v358 = vand.u32 %v31, 4294901760
    %359 = vmatprep.subr.mxu0 %v358
    %v360 = vand.u32 %v30, 4294901760
    %361 = vmatpush1.msra.mxu0 %v360
    %v362 = vand.u32 %v39, 4294901760
    %363 = vmatprep.subr.mxu0 %v362
    %v364 = vand.u32 %v38, 4294901760
    %365 = vmatpush1.msra.mxu0 %v364
    %v366 = vand.u32 %v69, 4294901760
    %367 = vmatprep.subr.mxu0 %v366
    %v368 = vand.u32 %v66, 4294901760
    %369 = vmatpush1.msra.mxu0 %v368
    %370 = vmatprep.subr.mxu0 0.0
    %371 = vmatpush1.msra.mxu0 0.0
    %372 = vmatprep.subr.mxu0 0.0
    %373 = vmatpush1.msra.mxu0 0.0
    %374 = vmatprep.subr.mxu0 0.0
    %375 = vmatpush1.msra.mxu0 0.0
    %376 = vmatprep.subr.mxu0 0.0
    %377 = vmatpush1.msra.mxu0 0.0
    %378 = vmatprep.subr.mxu0 0.0
    %379 = vmatpush1.msra.mxu0 0.0
    %380 = vmatprep.subr.mxu0 0.0
    %381 = vmatpush1.msra.mxu0 0.0
    %382 = vmatprep.subr.mxu0 0.0
    %383 = vmatpush1.msra.mxu0 0.0
    %384 = vmatprep.subr.mxu0 0.0
    %385 = vmatpush1.msra.mxu0 0.0
    %386 = vmatprep.subr.mxu0 0.0
    %387 = vmatpush1.msra.mxu0 0.0
    %388 = vmatprep.subr.mxu0 0.0
    %389 = vmatpush1.msra.mxu0 0.0
    %390 = vmatprep.subr.mxu0 0.0
    %391 = vmatpush1.msra.mxu0 0.0
    %392 = vmatprep.subr.mxu0 0.0
    %393 = vmatpush1.msra.mxu0 0.0
    %394 = vmatprep.subr.mxu0 0.0
    %395 = vmatpush1.msra.mxu0 0.0
    %396 = vmatprep.subr.mxu0 0.0
    %397 = vmatpush1.msra.mxu0 0.0
    %398 = vmatprep.subr.mxu0 0.0
    %399 = vmatpush1.msra.mxu0 0.0
    %400 = vmatprep.subr.mxu0 0.0
    %401 = vmatpush1.msra.mxu0 0.0
    %402 = vmatprep.subr.mxu0 0.0
    %403 = vmatpush1.msra.mxu0 0.0
    %404 = vmatprep.subr.mxu0 0.0
    %405 = vmatpush1.msra.mxu0 0.0
    %406 = vmatprep.subr.mxu0 0.0
    %407 = vmatpush1.msra.mxu0 0.0
    %408 = vmatprep.subr.mxu0 0.0
    %409 = vmatpush1.msra.mxu0 0.0
    %410 = vmatprep.subr.mxu0 0.0
    %411 = vmatpush1.msra.mxu0 0.0
    %412 = vmatprep.subr.mxu0 0.0
    %413 = vmatpush1.msra.mxu0 0.0
    %414 = vmatprep.subr.mxu0 0.0
    %415 = vmatpush1.msra.mxu0 0.0
    %416 = vmatprep.subr.mxu0 0.0
    %417 = vmatpush1.msra.mxu0 0.0
    %418 = vmatprep.subr.mxu0 0.0
    %419 = vmatpush1.msra.mxu0 0.0
    %420 = vmatprep.subr.mxu0 0.0
    %421 = vmatpush1.msra.mxu0 0.0
    %422 = vmatprep.subr.mxu0 0.0
    %423 = vmatpush1.msra.mxu0 0.0
    %424 = vmatprep.subr.mxu0 0.0
    %425 = vmatpush1.msra.mxu0 0.0
    %426 = vmatprep.subr.mxu0 0.0
    %427 = vmatpush1.msra.mxu0 0.0
    %428 = vmatprep.mubr.f32.mxu0 0.0
    %v429 = vand.u32 %v62, 4294901760
    %v430 = vsub.f32 %v62, %v429
    %v431 = vand.u32 %v430, 4294901760
    %432 = vmatmul.mubr.f32.gmra.mrb[0].mxu0 %v431
    %v433 = vpop.f32.mrb[0].mxu0
    %v434 = vadd.f32 %v354, %v433
    %v435 = vpop.f32.mrb[0].mxu0
    %v436 = vadd.f32 %v356, %v435
    %437 = vdwg.mxu0
    %v438 = vand.u32 %v31, 4294901760
    %v439 = vsub.f32 %v31, %v438
    %v440 = vand.u32 %v439, 4294901760
    %441 = vmatprep.subr.mxu0 %v440
    %v442 = vand.u32 %v30, 4294901760
    %v443 = vsub.f32 %v30, %v442
    %v444 = vand.u32 %v443, 4294901760
    %445 = vmatpush1.msra.mxu0 %v444
    %v446 = vand.u32 %v39, 4294901760
    %v447 = vsub.f32 %v39, %v446
    %v448 = vand.u32 %v447, 4294901760
    %449 = vmatprep.subr.mxu0 %v448
    %v450 = vand.u32 %v38, 4294901760
    %v451 = vsub.f32 %v38, %v450
    %v452 = vand.u32 %v451, 4294901760
    %453 = vmatpush1.msra.mxu0 %v452
    %v454 = vand.u32 %v69, 4294901760
    %v455 = vsub.f32 %v69, %v454
    %v456 = vand.u32 %v455, 4294901760
    %457 = vmatprep.subr.mxu0 %v456
    %v458 = vand.u32 %v66, 4294901760
    %v459 = vsub.f32 %v66, %v458
    %v460 = vand.u32 %v459, 4294901760
    %461 = vmatpush1.msra.mxu0 %v460
    %462 = vmatprep.subr.mxu0 0.0
    %463 = vmatpush1.msra.mxu0 0.0
    %464 = vmatprep.subr.mxu0 0.0
    %465 = vmatpush1.msra.mxu0 0.0
    %466 = vmatprep.subr.mxu0 0.0
    %467 = vmatpush1.msra.mxu0 0.0
    %468 = vmatprep.subr.mxu0 0.0
    %469 = vmatpush1.msra.mxu0 0.0
    %470 = vmatprep.subr.mxu0 0.0
    %471 = vmatpush1.msra.mxu0 0.0
    %472 = vmatprep.subr.mxu0 0.0
    %473 = vmatpush1.msra.mxu0 0.0
    %474 = vmatprep.subr.mxu0 0.0
    %475 = vmatpush1.msra.mxu0 0.0
    %476 = vmatprep.subr.mxu0 0.0
    %477 = vmatpush1.msra.mxu0 0.0
    %478 = vmatprep.subr.mxu0 0.0
    %479 = vmatpush1.msra.mxu0 0.0
    %480 = vmatprep.subr.mxu0 0.0
    %481 = vmatpush1.msra.mxu0 0.0
    %482 = vmatprep.subr.mxu0 0.0
    %483 = vmatpush1.msra.mxu0 0.0
    %484 = vmatprep.subr.mxu0 0.0
    %485 = vmatpush1.msra.mxu0 0.0
    %486 = vmatprep.subr.mxu0 0.0
    %487 = vmatpush1.msra.mxu0 0.0
    %488 = vmatprep.subr.mxu0 0.0
    %489 = vmatpush1.msra.mxu0 0.0
    %490 = vmatprep.subr.mxu0 0.0
    %491 = vmatpush1.msra.mxu0 0.0
    %492 = vmatprep.subr.mxu0 0.0
    %493 = vmatpush1.msra.mxu0 0.0
    %494 = vmatprep.subr.mxu0 0.0
    %495 = vmatpush1.msra.mxu0 0.0
    %496 = vmatprep.subr.mxu0 0.0
    %497 = vmatpush1.msra.mxu0 0.0
    %498 = vmatprep.subr.mxu0 0.0
    %499 = vmatpush1.msra.mxu0 0.0
    %500 = vmatprep.subr.mxu0 0.0
    %501 = vmatpush1.msra.mxu0 0.0
    %502 = vmatprep.subr.mxu0 0.0
    %503 = vmatpush1.msra.mxu0 0.0
    %504 = vmatprep.subr.mxu0 0.0
    %505 = vmatpush1.msra.mxu0 0.0
    %506 = vmatprep.subr.mxu0 0.0
    %507 = vmatpush1.msra.mxu0 0.0
    %508 = vmatprep.subr.mxu0 0.0
    %509 = vmatpush1.msra.mxu0 0.0
    %510 = vmatprep.subr.mxu0 0.0
    %511 = vmatpush1.msra.mxu0 0.0
    %512 = vmatprep.subr.mxu0 0.0
    %513 = vmatpush1.msra.mxu0 0.0
    %514 = vmatprep.subr.mxu0 0.0
    %515 = vmatpush1.msra.mxu0 0.0
    %516 = vmatprep.subr.mxu0 0.0
    %517 = vmatpush1.msra.mxu0 0.0
    %518 = vmatprep.subr.mxu0 0.0
    %519 = vmatpush1.msra.mxu0 0.0
    %520 = vmatprep.mubr.f32.mxu0 0.0
    %v521 = vand.u32 %v62, 4294901760
    %522 = vmatmul.mubr.f32.gmra.mrb[0].mxu0 %v521
    %v523 = vpop.f32.mrb[0].mxu0
    %v524 = vadd.f32 %v434, %v523
    %v525 = vpop.f32.mrb[0].mxu0
    %v526 = vadd.f32 %v436, %v525
    %527 = vdwg.mxu0
    %v528 = vand.u32 %v31, 4294901760
    %529 = vmatprep.subr.mxu0 %v528
    %v530 = vand.u32 %v30, 4294901760
    %531 = vmatpush1.msra.mxu0 %v530
    %v532 = vand.u32 %v39, 4294901760
    %533 = vmatprep.subr.mxu0 %v532
    %v534 = vand.u32 %v38, 4294901760
    %535 = vmatpush1.msra.mxu0 %v534
    %v536 = vand.u32 %v69, 4294901760
    %537 = vmatprep.subr.mxu0 %v536
    %v538 = vand.u32 %v66, 4294901760
    %539 = vmatpush1.msra.mxu0 %v538
    %540 = vmatprep.subr.mxu0 0.0
    %541 = vmatpush1.msra.mxu0 0.0
    %542 = vmatprep.subr.mxu0 0.0
    %543 = vmatpush1.msra.mxu0 0.0
    %544 = vmatprep.subr.mxu0 0.0
    %545 = vmatpush1.msra.mxu0 0.0
    %546 = vmatprep.subr.mxu0 0.0
    %547 = vmatpush1.msra.mxu0 0.0
    %548 = vmatprep.subr.mxu0 0.0
    %549 = vmatpush1.msra.mxu0 0.0
    %550 = vmatprep.subr.mxu0 0.0
    %551 = vmatpush1.msra.mxu0 0.0
    %552 = vmatprep.subr.mxu0 0.0
    %553 = vmatpush1.msra.mxu0 0.0
    %554 = vmatprep.subr.mxu0 0.0
    %555 = vmatpush1.msra.mxu0 0.0
    %556 = vmatprep.subr.mxu0 0.0
    %557 = vmatpush1.msra.mxu0 0.0
    %558 = vmatprep.subr.mxu0 0.0
    %559 = vmatpush1.msra.mxu0 0.0
    %560 = vmatprep.subr.mxu0 0.0
    %561 = vmatpush1.msra.mxu0 0.0
    %562 = vmatprep.subr.mxu0 0.0
    %563 = vmatpush1.msra.mxu0 0.0
    %564 = vmatprep.subr.mxu0 0.0
    %565 = vmatpush1.msra.mxu0 0.0
    %566 = vmatprep.subr.mxu0 0.0
    %567 = vmatpush1.msra.mxu0 0.0
    %568 = vmatprep.subr.mxu0 0.0
    %569 = vmatpush1.msra.mxu0 0.0
    %570 = vmatprep.subr.mxu0 0.0
    %571 = vmatpush1.msra.mxu0 0.0
    %572 = vmatprep.subr.mxu0 0.0
    %573 = vmatpush1.msra.mxu0 0.0
    %574 = vmatprep.subr.mxu0 0.0
    %575 = vmatpush1.msra.mxu0 0.0
    %576 = vmatprep.subr.mxu0 0.0
    %577 = vmatpush1.msra.mxu0 0.0
    %578 = vmatprep.subr.mxu0 0.0
    %579 = vmatpush1.msra.mxu0 0.0
    %580 = vmatprep.subr.mxu0 0.0
    %581 = vmatpush1.msra.mxu0 0.0
    %582 = vmatprep.subr.mxu0 0.0
    %583 = vmatpush1.msra.mxu0 0.0
    %584 = vmatprep.subr.mxu0 0.0
    %585 = vmatpush1.msra.mxu0 0.0
    %586 = vmatprep.subr.mxu0 0.0
    %587 = vmatpush1.msra.mxu0 0.0
    %588 = vmatprep.subr.mxu0 0.0
    %589 = vmatpush1.msra.mxu0 0.0
    %590 = vmatprep.subr.mxu0 0.0
    %591 = vmatpush1.msra.mxu0 0.0
    %592 = vmatprep.subr.mxu0 0.0
    %593 = vmatpush1.msra.mxu0 0.0
    %594 = vmatprep.subr.mxu0 0.0
    %595 = vmatpush1.msra.mxu0 0.0
    %596 = vmatprep.subr.mxu0 0.0
    %597 = vmatpush1.msra.mxu0 0.0
    %598 = vmatprep.mubr.f32.mxu0 0.0
    %v599 = vand.u32 %v62, 4294901760
    %600 = vmatmul.mubr.f32.gmra.mrb[0].mxu0 %v599
    %v601 = vpop.f32.mrb[0].mxu0
    %v602 = vadd.f32 %v524, %v601
    %v603 = vpop.f32.mrb[0].mxu0
    %v604 = vadd.f32 %v526, %v603
    %605 = vdwg.mxu0
    %v606 = vand.u32 %v33, 4294901760
    %607 = vmatprep.subr.mxu0 %v606
    %v608 = vand.u32 %v32, 4294901760
    %609 = vmatpush1.msra.mxu0 %v608
    %v610 = vand.u32 %v41, 4294901760
    %611 = vmatprep.subr.mxu0 %v610
    %v612 = vand.u32 %v40, 4294901760
    %613 = vmatpush1.msra.mxu0 %v612
    %v614 = vand.u32 %v75, 4294901760
    %615 = vmatprep.subr.mxu0 %v614
    %v616 = vand.u32 %v72, 4294901760
    %617 = vmatpush1.msra.mxu0 %v616
    %618 = vmatprep.subr.mxu0 0.0
    %619 = vmatpush1.msra.mxu0 0.0
    %620 = vmatprep.subr.mxu0 0.0
    %621 = vmatpush1.msra.mxu0 0.0
    %622 = vmatprep.subr.mxu0 0.0
    %623 = vmatpush1.msra.mxu0 0.0
    %624 = vmatprep.subr.mxu0 0.0
    %625 = vmatpush1.msra.mxu0 0.0
    %626 = vmatprep.subr.mxu0 0.0
    %627 = vmatpush1.msra.mxu0 0.0
    %628 = vmatprep.subr.mxu0 0.0
    %629 = vmatpush1.msra.mxu0 0.0
    %630 = vmatprep.subr.mxu0 0.0
    %631 = vmatpush1.msra.mxu0 0.0
    %632 = vmatprep.subr.mxu0 0.0
    %633 = vmatpush1.msra.mxu0 0.0
    %634 = vmatprep.subr.mxu0 0.0
    %635 = vmatpush1.msra.mxu0 0.0
    %636 = vmatprep.subr.mxu0 0.0
    %637 = vmatpush1.msra.mxu0 0.0
    %638 = vmatprep.subr.mxu0 0.0
    %639 = vmatpush1.msra.mxu0 0.0
    %640 = vmatprep.subr.mxu0 0.0
    %641 = vmatpush1.msra.mxu0 0.0
    %642 = vmatprep.subr.mxu0 0.0
    %643 = vmatpush1.msra.mxu0 0.0
    %644 = vmatprep.subr.mxu0 0.0
    %645 = vmatpush1.msra.mxu0 0.0
    %646 = vmatprep.subr.mxu0 0.0
    %647 = vmatpush1.msra.mxu0 0.0
    %648 = vmatprep.subr.mxu0 0.0
    %649 = vmatpush1.msra.mxu0 0.0
    %650 = vmatprep.subr.mxu0 0.0
    %651 = vmatpush1.msra.mxu0 0.0
    %652 = vmatprep.subr.mxu0 0.0
    %653 = vmatpush1.msra.mxu0 0.0
    %654 = vmatprep.subr.mxu0 0.0
    %655 = vmatpush1.msra.mxu0 0.0
    %656 = vmatprep.subr.mxu0 0.0
    %657 = vmatpush1.msra.mxu0 0.0
    %658 = vmatprep.subr.mxu0 0.0
    %659 = vmatpush1.msra.mxu0 0.0
    %660 = vmatprep.subr.mxu0 0.0
    %661 = vmatpush1.msra.mxu0 0.0
    %662 = vmatprep.subr.mxu0 0.0
    %663 = vmatpush1.msra.mxu0 0.0
    %664 = vmatprep.subr.mxu0 0.0
    %665 = vmatpush1.msra.mxu0 0.0
    %666 = vmatprep.subr.mxu0 0.0
    %667 = vmatpush1.msra.mxu0 0.0
    %668 = vmatprep.subr.mxu0 0.0
    %669 = vmatpush1.msra.mxu0 0.0
    %670 = vmatprep.subr.mxu0 0.0
    %671 = vmatpush1.msra.mxu0 0.0
    %672 = vmatprep.subr.mxu0 0.0
    %673 = vmatpush1.msra.mxu0 0.0
    %674 = vmatprep.subr.mxu0 0.0
    %675 = vmatpush1.msra.mxu0 0.0
    %676 = vmatprep.mubr.f32.mxu0 0.0
    %v677 = vand.u32 %v62, 4294901760
    %v678 = vsub.f32 %v62, %v677
    %v679 = vand.u32 %v678, 4294901760
    %v680 = vsub.f32 %v678, %v679
    %v681 = vand.u32 %v680, 4294901760
    %682 = vmatmul.mubr.f32.gmra.mrb[0].mxu0 %v681
    %v683 = vpop.f32.mrb[0].mxu0
    %v684 = vadd.f32 %v58, %v683
    %v685 = vpop.f32.mrb[0].mxu0
    %v686 = vadd.f32 %v58, %v685
    %687 = vdwg.mxu0
    %v688 = vand.u32 %v33, 4294901760
    %v689 = vsub.f32 %v33, %v688
    %v690 = vand.u32 %v689, 4294901760
    %v691 = vsub.f32 %v689, %v690
    %v692 = vand.u32 %v691, 4294901760
    %693 = vmatprep.subr.mxu0 %v692
    %v694 = vand.u32 %v32, 4294901760
    %v695 = vsub.f32 %v32, %v694
    %v696 = vand.u32 %v695, 4294901760
    %v697 = vsub.f32 %v695, %v696
    %v698 = vand.u32 %v697, 4294901760
    %699 = vmatpush1.msra.mxu0 %v698
    %v700 = vand.u32 %v41, 4294901760
    %v701 = vsub.f32 %v41, %v700
    %v702 = vand.u32 %v701, 4294901760
    %v703 = vsub.f32 %v701, %v702
    %v704 = vand.u32 %v703, 4294901760
    %705 = vmatprep.subr.mxu0 %v704
    %v706 = vand.u32 %v40, 4294901760
    %v707 = vsub.f32 %v40, %v706
    %v708 = vand.u32 %v707, 4294901760
    %v709 = vsub.f32 %v707, %v708
    %v710 = vand.u32 %v709, 4294901760
    %711 = vmatpush1.msra.mxu0 %v710
    %v712 = vand.u32 %v75, 4294901760
    %v713 = vsub.f32 %v75, %v712
    %v714 = vand.u32 %v713, 4294901760
    %v715 = vsub.f32 %v713, %v714
    %v716 = vand.u32 %v715, 4294901760
    %717 = vmatprep.subr.mxu0 %v716
    %v718 = vand.u32 %v72, 4294901760
    %v719 = vsub.f32 %v72, %v718
    %v720 = vand.u32 %v719, 4294901760
    %v721 = vsub.f32 %v719, %v720
    %v722 = vand.u32 %v721, 4294901760
    %723 = vmatpush1.msra.mxu0 %v722
    %724 = vmatprep.subr.mxu0 0.0
    %725 = vmatpush1.msra.mxu0 0.0
    %726 = vmatprep.subr.mxu0 0.0
    %727 = vmatpush1.msra.mxu0 0.0
    %728 = vmatprep.subr.mxu0 0.0
    %729 = vmatpush1.msra.mxu0 0.0
    %730 = vmatprep.subr.mxu0 0.0
    %731 = vmatpush1.msra.mxu0 0.0
    %732 = vmatprep.subr.mxu0 0.0
    %733 = vmatpush1.msra.mxu0 0.0
    %734 = vmatprep.subr.mxu0 0.0
    %735 = vmatpush1.msra.mxu0 0.0
    %736 = vmatprep.subr.mxu0 0.0
    %737 = vmatpush1.msra.mxu0 0.0
    %738 = vmatprep.subr.mxu0 0.0
    %739 = vmatpush1.msra.mxu0 0.0
    %740 = vmatprep.subr.mxu0 0.0
    %741 = vmatpush1.msra.mxu0 0.0
    %742 = vmatprep.subr.mxu0 0.0
    %743 = vmatpush1.msra.mxu0 0.0
    %744 = vmatprep.subr.mxu0 0.0
    %745 = vmatpush1.msra.mxu0 0.0
    %746 = vmatprep.subr.mxu0 0.0
    %747 = vmatpush1.msra.mxu0 0.0
    %748 = vmatprep.subr.mxu0 0.0
    %749 = vmatpush1.msra.mxu0 0.0
    %750 = vmatprep.subr.mxu0 0.0
    %751 = vmatpush1.msra.mxu0 0.0
    %752 = vmatprep.subr.mxu0 0.0
    %753 = vmatpush1.msra.mxu0 0.0
    %754 = vmatprep.subr.mxu0 0.0
    %755 = vmatpush1.msra.mxu0 0.0
    %756 = vmatprep.subr.mxu0 0.0
    %757 = vmatpush1.msra.mxu0 0.0
    %758 = vmatprep.subr.mxu0 0.0
    %759 = vmatpush1.msra.mxu0 0.0
    %760 = vmatprep.subr.mxu0 0.0
    %761 = vmatpush1.msra.mxu0 0.0
    %762 = vmatprep.subr.mxu0 0.0
    %763 = vmatpush1.msra.mxu0 0.0
    %764 = vmatprep.subr.mxu0 0.0
    %765 = vmatpush1.msra.mxu0 0.0
    %766 = vmatprep.subr.mxu0 0.0
    %767 = vmatpush1.msra.mxu0 0.0
    %768 = vmatprep.subr.mxu0 0.0
    %769 = vmatpush1.msra.mxu0 0.0
    %770 = vmatprep.subr.mxu0 0.0
    %771 = vmatpush1.msra.mxu0 0.0
    %772 = vmatprep.subr.mxu0 0.0
    %773 = vmatpush1.msra.mxu0 0.0
    %774 = vmatprep.subr.mxu0 0.0
    %775 = vmatpush1.msra.mxu0 0.0
    %776 = vmatprep.subr.mxu0 0.0
    %777 = vmatpush1.msra.mxu0 0.0
    %778 = vmatprep.subr.mxu0 0.0
    %779 = vmatpush1.msra.mxu0 0.0
    %780 = vmatprep.subr.mxu0 0.0
    %781 = vmatpush1.msra.mxu0 0.0
    %782 = vmatprep.mubr.f32.mxu0 0.0
    %v783 = vand.u32 %v62, 4294901760
    %784 = vmatmul.mubr.f32.gmra.mrb[0].mxu0 %v783
    %v785 = vpop.f32.mrb[0].mxu0
    %v786 = vadd.f32 %v684, %v785
    %v787 = vpop.f32.mrb[0].mxu0
    %v788 = vadd.f32 %v686, %v787
    %789 = vdwg.mxu0
    %v790 = vand.u32 %v33, 4294901760
    %v791 = vsub.f32 %v33, %v790
    %792 = vmatprep.subr.mxu0 %v791
    %v793 = vand.u32 %v32, 4294901760
    %v794 = vsub.f32 %v32, %v793
    %795 = vmatpush1.msra.mxu0 %v794
    %v796 = vand.u32 %v41, 4294901760
    %v797 = vsub.f32 %v41, %v796
    %798 = vmatprep.subr.mxu0 %v797
    %v799 = vand.u32 %v40, 4294901760
    %v800 = vsub.f32 %v40, %v799
    %801 = vmatpush1.msra.mxu0 %v800
    %v802 = vand.u32 %v75, 4294901760
    %v803 = vsub.f32 %v75, %v802
    %804 = vmatprep.subr.mxu0 %v803
    %v805 = vand.u32 %v72, 4294901760
    %v806 = vsub.f32 %v72, %v805
    %807 = vmatpush1.msra.mxu0 %v806
    %808 = vmatprep.subr.mxu0 0.0
    %809 = vmatpush1.msra.mxu0 0.0
    %810 = vmatprep.subr.mxu0 0.0
    %811 = vmatpush1.msra.mxu0 0.0
    %812 = vmatprep.subr.mxu0 0.0
    %813 = vmatpush1.msra.mxu0 0.0
    %814 = vmatprep.subr.mxu0 0.0
    %815 = vmatpush1.msra.mxu0 0.0
    %816 = vmatprep.subr.mxu0 0.0
    %817 = vmatpush1.msra.mxu0 0.0
    %818 = vmatprep.subr.mxu0 0.0
    %819 = vmatpush1.msra.mxu0 0.0
    %820 = vmatprep.subr.mxu0 0.0
    %821 = vmatpush1.msra.mxu0 0.0
    %822 = vmatprep.subr.mxu0 0.0
    %823 = vmatpush1.msra.mxu0 0.0
    %824 = vmatprep.subr.mxu0 0.0
    %825 = vmatpush1.msra.mxu0 0.0
    %826 = vmatprep.subr.mxu0 0.0
    %827 = vmatpush1.msra.mxu0 0.0
    %828 = vmatprep.subr.mxu0 0.0
    %829 = vmatpush1.msra.mxu0 0.0
    %830 = vmatprep.subr.mxu0 0.0
    %831 = vmatpush1.msra.mxu0 0.0
    %832 = vmatprep.subr.mxu0 0.0
    %833 = vmatpush1.msra.mxu0 0.0
    %834 = vmatprep.subr.mxu0 0.0
    %835 = vmatpush1.msra.mxu0 0.0
    %836 = vmatprep.subr.mxu0 0.0
    %837 = vmatpush1.msra.mxu0 0.0
    %838 = vmatprep.subr.mxu0 0.0
    %839 = vmatpush1.msra.mxu0 0.0
    %840 = vmatprep.subr.mxu0 0.0
    %841 = vmatpush1.msra.mxu0 0.0
    %842 = vmatprep.subr.mxu0 0.0
    %843 = vmatpush1.msra.mxu0 0.0
    %844 = vmatprep.subr.mxu0 0.0
    %845 = vmatpush1.msra.mxu0 0.0
    %846 = vmatprep.subr.mxu0 0.0
    %847 = vmatpush1.msra.mxu0 0.0
    %848 = vmatprep.subr.mxu0 0.0
    %849 = vmatpush1.msra.mxu0 0.0
    %850 = vmatprep.subr.mxu0 0.0
    %851 = vmatpush1.msra.mxu0 0.0
    %852 = vmatprep.subr.mxu0 0.0
    %853 = vmatpush1.msra.mxu0 0.0
    %854 = vmatprep.subr.mxu0 0.0
    %855 = vmatpush1.msra.mxu0 0.0
    %856 = vmatprep.subr.mxu0 0.0
    %857 = vmatpush1.msra.mxu0 0.0
    %858 = vmatprep.subr.mxu0 0.0
    %859 = vmatpush1.msra.mxu0 0.0
    %860 = vmatprep.subr.mxu0 0.0
    %861 = vmatpush1.msra.mxu0 0.0
    %862 = vmatprep.subr.mxu0 0.0
    %863 = vmatpush1.msra.mxu0 0.0
    %864 = vmatprep.subr.mxu0 0.0
    %865 = vmatpush1.msra.mxu0 0.0
    %866 = vmatprep.mubr.f32.mxu0 0.0
    %v867 = vand.u32 %v62, 4294901760
    %v868 = vsub.f32 %v62, %v867
    %869 = vmatmul.mubr.f32.gmra.mrb[0].mxu0 %v868
    %v870 = vpop.f32.mrb[0].mxu0
    %v871 = vadd.f32 %v786, %v870
    %v872 = vpop.f32.mrb[0].mxu0
    %v873 = vadd.f32 %v788, %v872
    %874 = vdwg.mxu0
    %v875 = vand.u32 %v33, 4294901760
    %876 = vmatprep.subr.mxu0 %v875
    %v877 = vand.u32 %v32, 4294901760
    %878 = vmatpush1.msra.mxu0 %v877
    %v879 = vand.u32 %v41, 4294901760
    %880 = vmatprep.subr.mxu0 %v879
    %v881 = vand.u32 %v40, 4294901760
    %882 = vmatpush1.msra.mxu0 %v881
    %v883 = vand.u32 %v75, 4294901760
    %884 = vmatprep.subr.mxu0 %v883
    %v885 = vand.u32 %v72, 4294901760
    %886 = vmatpush1.msra.mxu0 %v885
    %887 = vmatprep.subr.mxu0 0.0
    %888 = vmatpush1.msra.mxu0 0.0
    %889 = vmatprep.subr.mxu0 0.0
    %890 = vmatpush1.msra.mxu0 0.0
    %891 = vmatprep.subr.mxu0 0.0
    %892 = vmatpush1.msra.mxu0 0.0
    %893 = vmatprep.subr.mxu0 0.0
    %894 = vmatpush1.msra.mxu0 0.0
    %895 = vmatprep.subr.mxu0 0.0
    %896 = vmatpush1.msra.mxu0 0.0
    %897 = vmatprep.subr.mxu0 0.0
    %898 = vmatpush1.msra.mxu0 0.0
    %899 = vmatprep.subr.mxu0 0.0
    %900 = vmatpush1.msra.mxu0 0.0
    %901 = vmatprep.subr.mxu0 0.0
    %902 = vmatpush1.msra.mxu0 0.0
    %903 = vmatprep.subr.mxu0 0.0
    %904 = vmatpush1.msra.mxu0 0.0
    %905 = vmatprep.subr.mxu0 0.0
    %906 = vmatpush1.msra.mxu0 0.0
    %907 = vmatprep.subr.mxu0 0.0
    %908 = vmatpush1.msra.mxu0 0.0
    %909 = vmatprep.subr.mxu0 0.0
    %910 = vmatpush1.msra.mxu0 0.0
    %911 = vmatprep.subr.mxu0 0.0
    %912 = vmatpush1.msra.mxu0 0.0
    %913 = vmatprep.subr.mxu0 0.0
    %914 = vmatpush1.msra.mxu0 0.0
    %915 = vmatprep.subr.mxu0 0.0
    %916 = vmatpush1.msra.mxu0 0.0
    %917 = vmatprep.subr.mxu0 0.0
    %918 = vmatpush1.msra.mxu0 0.0
    %919 = vmatprep.subr.mxu0 0.0
    %920 = vmatpush1.msra.mxu0 0.0
    %921 = vmatprep.subr.mxu0 0.0
    %922 = vmatpush1.msra.mxu0 0.0
    %923 = vmatprep.subr.mxu0 0.0
    %924 = vmatpush1.msra.mxu0 0.0
    %925 = vmatprep.subr.mxu0 0.0
    %926 = vmatpush1.msra.mxu0 0.0
    %927 = vmatprep.subr.mxu0 0.0
    %928 = vmatpush1.msra.mxu0 0.0
    %929 = vmatprep.subr.mxu0 0.0
    %930 = vmatpush1.msra.mxu0 0.0
    %931 = vmatprep.subr.mxu0 0.0
    %932 = vmatpush1.msra.mxu0 0.0
    %933 = vmatprep.subr.mxu0 0.0
    %934 = vmatpush1.msra.mxu0 0.0
    %935 = vmatprep.subr.mxu0 0.0
    %936 = vmatpush1.msra.mxu0 0.0
    %937 = vmatprep.subr.mxu0 0.0
    %938 = vmatpush1.msra.mxu0 0.0
    %939 = vmatprep.subr.mxu0 0.0
    %940 = vmatpush1.msra.mxu0 0.0
    %941 = vmatprep.subr.mxu0 0.0
    %942 = vmatpush1.msra.mxu0 0.0
    %943 = vmatprep.subr.mxu0 0.0
    %944 = vmatpush1.msra.mxu0 0.0
    %945 = vmatprep.mubr.f32.mxu0 0.0
    %v946 = vand.u32 %v62, 4294901760
    %v947 = vsub.f32 %v62, %v946
    %v948 = vand.u32 %v947, 4294901760
    %949 = vmatmul.mubr.f32.gmra.mrb[0].mxu0 %v948
    %v950 = vpop.f32.mrb[0].mxu0
    %v951 = vadd.f32 %v871, %v950
    %v952 = vpop.f32.mrb[0].mxu0
    %v953 = vadd.f32 %v873, %v952
    %954 = vdwg.mxu0
    %v955 = vand.u32 %v33, 4294901760
    %v956 = vsub.f32 %v33, %v955
    %v957 = vand.u32 %v956, 4294901760
    %958 = vmatprep.subr.mxu0 %v957
    %v959 = vand.u32 %v32, 4294901760
    %v960 = vsub.f32 %v32, %v959
    %v961 = vand.u32 %v960, 4294901760
    %962 = vmatpush1.msra.mxu0 %v961
    %v963 = vand.u32 %v41, 4294901760
    %v964 = vsub.f32 %v41, %v963
    %v965 = vand.u32 %v964, 4294901760
    %966 = vmatprep.subr.mxu0 %v965
    %v967 = vand.u32 %v40, 4294901760
    %v968 = vsub.f32 %v40, %v967
    %v969 = vand.u32 %v968, 4294901760
    %970 = vmatpush1.msra.mxu0 %v969
    %v971 = vand.u32 %v75, 4294901760
    %v972 = vsub.f32 %v75, %v971
    %v973 = vand.u32 %v972, 4294901760
    %974 = vmatprep.subr.mxu0 %v973
    %v975 = vand.u32 %v72, 4294901760
    %v976 = vsub.f32 %v72, %v975
    %v977 = vand.u32 %v976, 4294901760
    %978 = vmatpush1.msra.mxu0 %v977
    %979 = vmatprep.subr.mxu0 0.0
    %980 = vmatpush1.msra.mxu0 0.0
    %981 = vmatprep.subr.mxu0 0.0
    %982 = vmatpush1.msra.mxu0 0.0
    %983 = vmatprep.subr.mxu0 0.0
    %984 = vmatpush1.msra.mxu0 0.0
    %985 = vmatprep.subr.mxu0 0.0
    %986 = vmatpush1.msra.mxu0 0.0
    %987 = vmatprep.subr.mxu0 0.0
    %988 = vmatpush1.msra.mxu0 0.0
    %989 = vmatprep.subr.mxu0 0.0
    %990 = vmatpush1.msra.mxu0 0.0
    %991 = vmatprep.subr.mxu0 0.0
    %992 = vmatpush1.msra.mxu0 0.0
    %993 = vmatprep.subr.mxu0 0.0
    %994 = vmatpush1.msra.mxu0 0.0
    %995 = vmatprep.subr.mxu0 0.0
    %996 = vmatpush1.msra.mxu0 0.0
    %997 = vmatprep.subr.mxu0 0.0
    %998 = vmatpush1.msra.mxu0 0.0
    %999 = vmatprep.subr.mxu0 0.0
    %1000 = vmatpush1.msra.mxu0 0.0
    %1001 = vmatprep.subr.mxu0 0.0
    %1002 = vmatpush1.msra.mxu0 0.0
    %1003 = vmatprep.subr.mxu0 0.0
    %1004 = vmatpush1.msra.mxu0 0.0
    %1005 = vmatprep.subr.mxu0 0.0
    %1006 = vmatpush1.msra.mxu0 0.0
    %1007 = vmatprep.subr.mxu0 0.0
    %1008 = vmatpush1.msra.mxu0 0.0
    %1009 = vmatprep.subr.mxu0 0.0
    %1010 = vmatpush1.msra.mxu0 0.0
    %1011 = vmatprep.subr.mxu0 0.0
    %1012 = vmatpush1.msra.mxu0 0.0
    %1013 = vmatprep.subr.mxu0 0.0
    %1014 = vmatpush1.msra.mxu0 0.0
    %1015 = vmatprep.subr.mxu0 0.0
    %1016 = vmatpush1.msra.mxu0 0.0
    %1017 = vmatprep.subr.mxu0 0.0
    %1018 = vmatpush1.msra.mxu0 0.0
    %1019 = vmatprep.subr.mxu0 0.0
    %1020 = vmatpush1.msra.mxu0 0.0
    %1021 = vmatprep.subr.mxu0 0.0
    %1022 = vmatpush1.msra.mxu0 0.0
    %1023 = vmatprep.subr.mxu0 0.0
    %1024 = vmatpush1.msra.mxu0 0.0
    %1025 = vmatprep.subr.mxu0 0.0
    %1026 = vmatpush1.msra.mxu0 0.0
    %1027 = vmatprep.subr.mxu0 0.0
    %1028 = vmatpush1.msra.mxu0 0.0
    %1029 = vmatprep.subr.mxu0 0.0
    %1030 = vmatpush1.msra.mxu0 0.0
    %1031 = vmatprep.subr.mxu0 0.0
    %1032 = vmatpush1.msra.mxu0 0.0
    %1033 = vmatprep.subr.mxu0 0.0
    %1034 = vmatpush1.msra.mxu0 0.0
    %1035 = vmatprep.subr.mxu0 0.0
    %1036 = vmatpush1.msra.mxu0 0.0
    %1037 = vmatprep.mubr.f32.mxu0 0.0
    %v1038 = vand.u32 %v62, 4294901760
    %1039 = vmatmul.mubr.f32.gmra.mrb[0].mxu0 %v1038
    %v1040 = vpop.f32.mrb[0].mxu0
    %v1041 = vadd.f32 %v951, %v1040
    %v1042 = vpop.f32.mrb[0].mxu0
    %v1043 = vadd.f32 %v953, %v1042
    %1044 = vdwg.mxu0
    %v1045 = vand.u32 %v33, 4294901760
    %1046 = vmatprep.subr.mxu0 %v1045
    %v1047 = vand.u32 %v32, 4294901760
    %1048 = vmatpush1.msra.mxu0 %v1047
    %v1049 = vand.u32 %v41, 4294901760
    %1050 = vmatprep.subr.mxu0 %v1049
    %v1051 = vand.u32 %v40, 4294901760
    %1052 = vmatpush1.msra.mxu0 %v1051
    %v1053 = vand.u32 %v75, 4294901760
    %1054 = vmatprep.subr.mxu0 %v1053
    %v1055 = vand.u32 %v72, 4294901760
    %1056 = vmatpush1.msra.mxu0 %v1055
    %1057 = vmatprep.subr.mxu0 0.0
    %1058 = vmatpush1.msra.mxu0 0.0
    %1059 = vmatprep.subr.mxu0 0.0
    %1060 = vmatpush1.msra.mxu0 0.0
    %1061 = vmatprep.subr.mxu0 0.0
    %1062 = vmatpush1.msra.mxu0 0.0
    %1063 = vmatprep.subr.mxu0 0.0
    %1064 = vmatpush1.msra.mxu0 0.0
    %1065 = vmatprep.subr.mxu0 0.0
    %1066 = vmatpush1.msra.mxu0 0.0
    %1067 = vmatprep.subr.mxu0 0.0
    %1068 = vmatpush1.msra.mxu0 0.0
    %1069 = vmatprep.subr.mxu0 0.0
    %1070 = vmatpush1.msra.mxu0 0.0
    %1071 = vmatprep.subr.mxu0 0.0
    %1072 = vmatpush1.msra.mxu0 0.0
    %1073 = vmatprep.subr.mxu0 0.0
    %1074 = vmatpush1.msra.mxu0 0.0
    %1075 = vmatprep.subr.mxu0 0.0
    %1076 = vmatpush1.msra.mxu0 0.0
    %1077 = vmatprep.subr.mxu0 0.0
    %1078 = vmatpush1.msra.mxu0 0.0
    %1079 = vmatprep.subr.mxu0 0.0
    %1080 = vmatpush1.msra.mxu0 0.0
    %1081 = vmatprep.subr.mxu0 0.0
    %1082 = vmatpush1.msra.mxu0 0.0
    %1083 = vmatprep.subr.mxu0 0.0
    %1084 = vmatpush1.msra.mxu0 0.0
    %1085 = vmatprep.subr.mxu0 0.0
    %1086 = vmatpush1.msra.mxu0 0.0
    %1087 = vmatprep.subr.mxu0 0.0
    %1088 = vmatpush1.msra.mxu0 0.0
    %1089 = vmatprep.subr.mxu0 0.0
    %1090 = vmatpush1.msra.mxu0 0.0
    %1091 = vmatprep.subr.mxu0 0.0
    %1092 = vmatpush1.msra.mxu0 0.0
    %1093 = vmatprep.subr.mxu0 0.0
    %1094 = vmatpush1.msra.mxu0 0.0
    %1095 = vmatprep.subr.mxu0 0.0
    %1096 = vmatpush1.msra.mxu0 0.0
    %1097 = vmatprep.subr.mxu0 0.0
    %1098 = vmatpush1.msra.mxu0 0.0
    %1099 = vmatprep.subr.mxu0 0.0
    %1100 = vmatpush1.msra.mxu0 0.0
    %1101 = vmatprep.subr.mxu0 0.0
    %1102 = vmatpush1.msra.mxu0 0.0
    %1103 = vmatprep.subr.mxu0 0.0
    %1104 = vmatpush1.msra.mxu0 0.0
    %1105 = vmatprep.subr.mxu0 0.0
    %1106 = vmatpush1.msra.mxu0 0.0
    %1107 = vmatprep.subr.mxu0 0.0
    %1108 = vmatpush1.msra.mxu0 0.0
    %1109 = vmatprep.subr.mxu0 0.0
    %1110 = vmatpush1.msra.mxu0 0.0
    %1111 = vmatprep.subr.mxu0 0.0
    %1112 = vmatpush1.msra.mxu0 0.0
    %1113 = vmatprep.subr.mxu0 0.0
    %1114 = vmatpush1.msra.mxu0 0.0
    %1115 = vmatprep.mubr.f32.mxu0 0.0
    %v1116 = vand.u32 %v62, 4294901760
    %1117 = vmatmul.mubr.f32.gmra.mrb[0].mxu0 %v1116
    %v1118 = vpop.f32.mrb[0].mxu0
    %v1119 = vadd.f32 %v1041, %v1118
    %v1120 = vpop.f32.mrb[0].mxu0
    %v1121 = vadd.f32 %v1043, %v1120
    %1122 = vdwg.mxu0
    %v1123 = vand.u32 %v35, 4294901760
    %1124 = vmatprep.subr.mxu0 %v1123
    %v1125 = vand.u32 %v34, 4294901760
    %1126 = vmatpush1.msra.mxu0 %v1125
    %v1127 = vand.u32 %v43, 4294901760
    %1128 = vmatprep.subr.mxu0 %v1127
    %v1129 = vand.u32 %v42, 4294901760
    %1130 = vmatpush1.msra.mxu0 %v1129
    %v1131 = vand.u32 %v81, 4294901760
    %1132 = vmatprep.subr.mxu0 %v1131
    %v1133 = vand.u32 %v78, 4294901760
    %1134 = vmatpush1.msra.mxu0 %v1133
    %1135 = vmatprep.subr.mxu0 0.0
    %1136 = vmatpush1.msra.mxu0 0.0
    %1137 = vmatprep.subr.mxu0 0.0
    %1138 = vmatpush1.msra.mxu0 0.0
    %1139 = vmatprep.subr.mxu0 0.0
    %1140 = vmatpush1.msra.mxu0 0.0
    %1141 = vmatprep.subr.mxu0 0.0
    %1142 = vmatpush1.msra.mxu0 0.0
    %1143 = vmatprep.subr.mxu0 0.0
    %1144 = vmatpush1.msra.mxu0 0.0
    %1145 = vmatprep.subr.mxu0 0.0
    %1146 = vmatpush1.msra.mxu0 0.0
    %1147 = vmatprep.subr.mxu0 0.0
    %1148 = vmatpush1.msra.mxu0 0.0
    %1149 = vmatprep.subr.mxu0 0.0
    %1150 = vmatpush1.msra.mxu0 0.0
    %1151 = vmatprep.subr.mxu0 0.0
    %1152 = vmatpush1.msra.mxu0 0.0
    %1153 = vmatprep.subr.mxu0 0.0
    %1154 = vmatpush1.msra.mxu0 0.0
    %1155 = vmatprep.subr.mxu0 0.0
    %1156 = vmatpush1.msra.mxu0 0.0
    %1157 = vmatprep.subr.mxu0 0.0
    %1158 = vmatpush1.msra.mxu0 0.0
    %1159 = vmatprep.subr.mxu0 0.0
    %1160 = vmatpush1.msra.mxu0 0.0
    %1161 = vmatprep.subr.mxu0 0.0
    %1162 = vmatpush1.msra.mxu0 0.0
    %1163 = vmatprep.subr.mxu0 0.0
    %1164 = vmatpush1.msra.mxu0 0.0
    %1165 = vmatprep.subr.mxu0 0.0
    %1166 = vmatpush1.msra.mxu0 0.0
    %1167 = vmatprep.subr.mxu0 0.0
    %1168 = vmatpush1.msra.mxu0 0.0
    %1169 = vmatprep.subr.mxu0 0.0
    %1170 = vmatpush1.msra.mxu0 0.0
    %1171 = vmatprep.subr.mxu0 0.0
    %1172 = vmatpush1.msra.mxu0 0.0
    %1173 = vmatprep.subr.mxu0 0.0
    %1174 = vmatpush1.msra.mxu0 0.0
    %1175 = vmatprep.subr.mxu0 0.0
    %1176 = vmatpush1.msra.mxu0 0.0
    %1177 = vmatprep.subr.mxu0 0.0
    %1178 = vmatpush1.msra.mxu0 0.0
    %1179 = vmatprep.subr.mxu0 0.0
    %1180 = vmatpush1.msra.mxu0 0.0
    %1181 = vmatprep.subr.mxu0 0.0
    %1182 = vmatpush1.msra.mxu0 0.0
    %1183 = vmatprep.subr.mxu0 0.0
    %1184 = vmatpush1.msra.mxu0 0.0
    %1185 = vmatprep.subr.mxu0 0.0
    %1186 = vmatpush1.msra.mxu0 0.0
    %1187 = vmatprep.subr.mxu0 0.0
    %1188 = vmatpush1.msra.mxu0 0.0
    %1189 = vmatprep.subr.mxu0 0.0
    %1190 = vmatpush1.msra.mxu0 0.0
    %1191 = vmatprep.subr.mxu0 0.0
    %1192 = vmatpush1.msra.mxu0 0.0
    %1193 = vmatprep.mubr.f32.mxu0 0.0
    %v1194 = vand.u32 %v62, 4294901760
    %v1195 = vsub.f32 %v62, %v1194
    %v1196 = vand.u32 %v1195, 4294901760
    %v1197 = vsub.f32 %v1195, %v1196
    %v1198 = vand.u32 %v1197, 4294901760
    %1199 = vmatmul.mubr.f32.gmra.mrb[0].mxu0 %v1198
    %v1200 = vpop.f32.mrb[0].mxu0
    %v1201 = vadd.f32 %v58, %v1200
    %v1202 = vpop.f32.mrb[0].mxu0
    %v1203 = vadd.f32 %v58, %v1202
    %1204 = vdwg.mxu0
    %v1205 = vand.u32 %v35, 4294901760
    %v1206 = vsub.f32 %v35, %v1205
    %v1207 = vand.u32 %v1206, 4294901760
    %v1208 = vsub.f32 %v1206, %v1207
    %v1209 = vand.u32 %v1208, 4294901760
    %1210 = vmatprep.subr.mxu0 %v1209
    %v1211 = vand.u32 %v34, 4294901760
    %v1212 = vsub.f32 %v34, %v1211
    %v1213 = vand.u32 %v1212, 4294901760
    %v1214 = vsub.f32 %v1212, %v1213
    %v1215 = vand.u32 %v1214, 4294901760
    %1216 = vmatpush1.msra.mxu0 %v1215
    %v1217 = vand.u32 %v43, 4294901760
    %v1218 = vsub.f32 %v43, %v1217
    %v1219 = vand.u32 %v1218, 4294901760
    %v1220 = vsub.f32 %v1218, %v1219
    %v1221 = vand.u32 %v1220, 4294901760
    %1222 = vmatprep.subr.mxu0 %v1221
    %v1223 = vand.u32 %v42, 4294901760
    %v1224 = vsub.f32 %v42, %v1223
    %v1225 = vand.u32 %v1224, 4294901760
    %v1226 = vsub.f32 %v1224, %v1225
    %v1227 = vand.u32 %v1226, 4294901760
    %1228 = vmatpush1.msra.mxu0 %v1227
    %v1229 = vand.u32 %v81, 4294901760
    %v1230 = vsub.f32 %v81, %v1229
    %v1231 = vand.u32 %v1230, 4294901760
    %v1232 = vsub.f32 %v1230, %v1231
    %v1233 = vand.u32 %v1232, 4294901760
    %1234 = vmatprep.subr.mxu0 %v1233
    %v1235 = vand.u32 %v78, 4294901760
    %v1236 = vsub.f32 %v78, %v1235
    %v1237 = vand.u32 %v1236, 4294901760
    %v1238 = vsub.f32 %v1236, %v1237
    %v1239 = vand.u32 %v1238, 4294901760
    %1240 = vmatpush1.msra.mxu0 %v1239
    %1241 = vmatprep.subr.mxu0 0.0
    %1242 = vmatpush1.msra.mxu0 0.0
    %1243 = vmatprep.subr.mxu0 0.0
    %1244 = vmatpush1.msra.mxu0 0.0
    %1245 = vmatprep.subr.mxu0 0.0
    %1246 = vmatpush1.msra.mxu0 0.0
    %1247 = vmatprep.subr.mxu0 0.0
    %1248 = vmatpush1.msra.mxu0 0.0
    %1249 = vmatprep.subr.mxu0 0.0
    %1250 = vmatpush1.msra.mxu0 0.0
    %1251 = vmatprep.subr.mxu0 0.0
    %1252 = vmatpush1.msra.mxu0 0.0
    %1253 = vmatprep.subr.mxu0 0.0
    %1254 = vmatpush1.msra.mxu0 0.0
    %1255 = vmatprep.subr.mxu0 0.0
    %1256 = vmatpush1.msra.mxu0 0.0
    %1257 = vmatprep.subr.mxu0 0.0
    %1258 = vmatpush1.msra.mxu0 0.0
    %1259 = vmatprep.subr.mxu0 0.0
    %1260 = vmatpush1.msra.mxu0 0.0
    %1261 = vmatprep.subr.mxu0 0.0
    %1262 = vmatpush1.msra.mxu0 0.0
    %1263 = vmatprep.subr.mxu0 0.0
    %1264 = vmatpush1.msra.mxu0 0.0
    %1265 = vmatprep.subr.mxu0 0.0
    %1266 = vmatpush1.msra.mxu0 0.0
    %1267 = vmatprep.subr.mxu0 0.0
    %1268 = vmatpush1.msra.mxu0 0.0
    %1269 = vmatprep.subr.mxu0 0.0
    %1270 = vmatpush1.msra.mxu0 0.0
    %1271 = vmatprep.subr.mxu0 0.0
    %1272 = vmatpush1.msra.mxu0 0.0
    %1273 = vmatprep.subr.mxu0 0.0
    %1274 = vmatpush1.msra.mxu0 0.0
    %1275 = vmatprep.subr.mxu0 0.0
    %1276 = vmatpush1.msra.mxu0 0.0
    %1277 = vmatprep.subr.mxu0 0.0
    %1278 = vmatpush1.msra.mxu0 0.0
    %1279 = vmatprep.subr.mxu0 0.0
    %1280 = vmatpush1.msra.mxu0 0.0
    %1281 = vmatprep.subr.mxu0 0.0
    %1282 = vmatpush1.msra.mxu0 0.0
    %1283 = vmatprep.subr.mxu0 0.0
    %1284 = vmatpush1.msra.mxu0 0.0
    %1285 = vmatprep.subr.mxu0 0.0
    %1286 = vmatpush1.msra.mxu0 0.0
    %1287 = vmatprep.subr.mxu0 0.0
    %1288 = vmatpush1.msra.mxu0 0.0
    %1289 = vmatprep.subr.mxu0 0.0
    %1290 = vmatpush1.msra.mxu0 0.0
    %1291 = vmatprep.subr.mxu0 0.0
    %1292 = vmatpush1.msra.mxu0 0.0
    %1293 = vmatprep.subr.mxu0 0.0
    %1294 = vmatpush1.msra.mxu0 0.0
    %1295 = vmatprep.subr.mxu0 0.0
    %1296 = vmatpush1.msra.mxu0 0.0
    %1297 = vmatprep.subr.mxu0 0.0
    %1298 = vmatpush1.msra.mxu0 0.0
    %1299 = vmatprep.mubr.f32.mxu0 0.0
    %v1300 = vand.u32 %v62, 4294901760
    %1301 = vmatmul.mubr.f32.gmra.mrb[0].mxu0 %v1300
    %v1302 = vpop.f32.mrb[0].mxu0
    %v1303 = vadd.f32 %v1201, %v1302
    %v1304 = vpop.f32.mrb[0].mxu0
    %v1305 = vadd.f32 %v1203, %v1304
    %1306 = vdwg.mxu0
    %v1307 = vand.u32 %v35, 4294901760
    %v1308 = vsub.f32 %v35, %v1307
    %1309 = vmatprep.subr.mxu0 %v1308
    %v1310 = vand.u32 %v34, 4294901760
    %v1311 = vsub.f32 %v34, %v1310
    %1312 = vmatpush1.msra.mxu0 %v1311
    %v1313 = vand.u32 %v43, 4294901760
    %v1314 = vsub.f32 %v43, %v1313
    %1315 = vmatprep.subr.mxu0 %v1314
    %v1316 = vand.u32 %v42, 4294901760
    %v1317 = vsub.f32 %v42, %v1316
    %1318 = vmatpush1.msra.mxu0 %v1317
    %v1319 = vand.u32 %v81, 4294901760
    %v1320 = vsub.f32 %v81, %v1319
    %1321 = vmatprep.subr.mxu0 %v1320
    %v1322 = vand.u32 %v78, 4294901760
    %v1323 = vsub.f32 %v78, %v1322
    %1324 = vmatpush1.msra.mxu0 %v1323
    %1325 = vmatprep.subr.mxu0 0.0
    %1326 = vmatpush1.msra.mxu0 0.0
    %1327 = vmatprep.subr.mxu0 0.0
    %1328 = vmatpush1.msra.mxu0 0.0
    %1329 = vmatprep.subr.mxu0 0.0
    %1330 = vmatpush1.msra.mxu0 0.0
    %1331 = vmatprep.subr.mxu0 0.0
    %1332 = vmatpush1.msra.mxu0 0.0
    %1333 = vmatprep.subr.mxu0 0.0
    %1334 = vmatpush1.msra.mxu0 0.0
    %1335 = vmatprep.subr.mxu0 0.0
    %1336 = vmatpush1.msra.mxu0 0.0
    %1337 = vmatprep.subr.mxu0 0.0
    %1338 = vmatpush1.msra.mxu0 0.0
    %1339 = vmatprep.subr.mxu0 0.0
    %1340 = vmatpush1.msra.mxu0 0.0
    %1341 = vmatprep.subr.mxu0 0.0
    %1342 = vmatpush1.msra.mxu0 0.0
    %1343 = vmatprep.subr.mxu0 0.0
    %1344 = vmatpush1.msra.mxu0 0.0
    %1345 = vmatprep.subr.mxu0 0.0
    %1346 = vmatpush1.msra.mxu0 0.0
    %1347 = vmatprep.subr.mxu0 0.0
    %1348 = vmatpush1.msra.mxu0 0.0
    %1349 = vmatprep.subr.mxu0 0.0
    %1350 = vmatpush1.msra.mxu0 0.0
    %1351 = vmatprep.subr.mxu0 0.0
    %1352 = vmatpush1.msra.mxu0 0.0
    %1353 = vmatprep.subr.mxu0 0.0
    %1354 = vmatpush1.msra.mxu0 0.0
    %1355 = vmatprep.subr.mxu0 0.0
    %1356 = vmatpush1.msra.mxu0 0.0
    %1357 = vmatprep.subr.mxu0 0.0
    %1358 = vmatpush1.msra.mxu0 0.0
    %1359 = vmatprep.subr.mxu0 0.0
    %1360 = vmatpush1.msra.mxu0 0.0
    %1361 = vmatprep.subr.mxu0 0.0
    %1362 = vmatpush1.msra.mxu0 0.0
    %1363 = vmatprep.subr.mxu0 0.0
    %1364 = vmatpush1.msra.mxu0 0.0
    %1365 = vmatprep.subr.mxu0 0.0
    %1366 = vmatpush1.msra.mxu0 0.0
    %1367 = vmatprep.subr.mxu0 0.0
    %1368 = vmatpush1.msra.mxu0 0.0
    %1369 = vmatprep.subr.mxu0 0.0
    %1370 = vmatpush1.msra.mxu0 0.0
    %1371 = vmatprep.subr.mxu0 0.0
    %1372 = vmatpush1.msra.mxu0 0.0
    %1373 = vmatprep.subr.mxu0 0.0
    %1374 = vmatpush1.msra.mxu0 0.0
    %1375 = vmatprep.subr.mxu0 0.0
    %1376 = vmatpush1.msra.mxu0 0.0
    %1377 = vmatprep.subr.mxu0 0.0
    %1378 = vmatpush1.msra.mxu0 0.0
    %1379 = vmatprep.subr.mxu0 0.0
    %1380 = vmatpush1.msra.mxu0 0.0
    %1381 = vmatprep.subr.mxu0 0.0
    %1382 = vmatpush1.msra.mxu0 0.0
    %1383 = vmatprep.mubr.f32.mxu0 0.0
    %v1384 = vand.u32 %v62, 4294901760
    %v1385 = vsub.f32 %v62, %v1384
    %1386 = vmatmul.mubr.f32.gmra.mrb[0].mxu0 %v1385
    %v1387 = vpop.f32.mrb[0].mxu0
    %v1388 = vadd.f32 %v1303, %v1387
    %v1389 = vpop.f32.mrb[0].mxu0
    %v1390 = vadd.f32 %v1305, %v1389
    %1391 = vdwg.mxu0
    %v1392 = vand.u32 %v35, 4294901760
    %1393 = vmatprep.subr.mxu0 %v1392
    %v1394 = vand.u32 %v34, 4294901760
    %1395 = vmatpush1.msra.mxu0 %v1394
    %v1396 = vand.u32 %v43, 4294901760
    %1397 = vmatprep.subr.mxu0 %v1396
    %v1398 = vand.u32 %v42, 4294901760
    %1399 = vmatpush1.msra.mxu0 %v1398
    %v1400 = vand.u32 %v81, 4294901760
    %1401 = vmatprep.subr.mxu0 %v1400
    %v1402 = vand.u32 %v78, 4294901760
    %1403 = vmatpush1.msra.mxu0 %v1402
    %1404 = vmatprep.subr.mxu0 0.0
    %1405 = vmatpush1.msra.mxu0 0.0
    %1406 = vmatprep.subr.mxu0 0.0
    %1407 = vmatpush1.msra.mxu0 0.0
    %1408 = vmatprep.subr.mxu0 0.0
    %1409 = vmatpush1.msra.mxu0 0.0
    %1410 = vmatprep.subr.mxu0 0.0
    %1411 = vmatpush1.msra.mxu0 0.0
    %1412 = vmatprep.subr.mxu0 0.0
    %1413 = vmatpush1.msra.mxu0 0.0
    %1414 = vmatprep.subr.mxu0 0.0
    %1415 = vmatpush1.msra.mxu0 0.0
    %1416 = vmatprep.subr.mxu0 0.0
    %1417 = vmatpush1.msra.mxu0 0.0
    %1418 = vmatprep.subr.mxu0 0.0
    %1419 = vmatpush1.msra.mxu0 0.0
    %1420 = vmatprep.subr.mxu0 0.0
    %1421 = vmatpush1.msra.mxu0 0.0
    %1422 = vmatprep.subr.mxu0 0.0
    %1423 = vmatpush1.msra.mxu0 0.0
    %1424 = vmatprep.subr.mxu0 0.0
    %1425 = vmatpush1.msra.mxu0 0.0
    %1426 = vmatprep.subr.mxu0 0.0
    %1427 = vmatpush1.msra.mxu0 0.0
    %1428 = vmatprep.subr.mxu0 0.0
    %1429 = vmatpush1.msra.mxu0 0.0
    %1430 = vmatprep.subr.mxu0 0.0
    %1431 = vmatpush1.msra.mxu0 0.0
    %1432 = vmatprep.subr.mxu0 0.0
    %1433 = vmatpush1.msra.mxu0 0.0
    %1434 = vmatprep.subr.mxu0 0.0
    %1435 = vmatpush1.msra.mxu0 0.0
    %1436 = vmatprep.subr.mxu0 0.0
    %1437 = vmatpush1.msra.mxu0 0.0
    %1438 = vmatprep.subr.mxu0 0.0
    %1439 = vmatpush1.msra.mxu0 0.0
    %1440 = vmatprep.subr.mxu0 0.0
    %1441 = vmatpush1.msra.mxu0 0.0
    %1442 = vmatprep.subr.mxu0 0.0
    %1443 = vmatpush1.msra.mxu0 0.0
    %1444 = vmatprep.subr.mxu0 0.0
    %1445 = vmatpush1.msra.mxu0 0.0
    %1446 = vmatprep.subr.mxu0 0.0
    %1447 = vmatpush1.msra.mxu0 0.0
    %1448 = vmatprep.subr.mxu0 0.0
    %1449 = vmatpush1.msra.mxu0 0.0
    %1450 = vmatprep.subr.mxu0 0.0
    %1451 = vmatpush1.msra.mxu0 0.0
    %1452 = vmatprep.subr.mxu0 0.0
    %1453 = vmatpush1.msra.mxu0 0.0
    %1454 = vmatprep.subr.mxu0 0.0
    %1455 = vmatpush1.msra.mxu0 0.0
    %1456 = vmatprep.subr.mxu0 0.0
    %1457 = vmatpush1.msra.mxu0 0.0
    %1458 = vmatprep.subr.mxu0 0.0
    %1459 = vmatpush1.msra.mxu0 0.0
    %1460 = vmatprep.subr.mxu0 0.0
    %1461 = vmatpush1.msra.mxu0 0.0
    %1462 = vmatprep.mubr.f32.mxu0 0.0
    %v1463 = vand.u32 %v62, 4294901760
    %v1464 = vsub.f32 %v62, %v1463
    %v1465 = vand.u32 %v1464, 4294901760
    %1466 = vmatmul.mubr.f32.gmra.mrb[0].mxu0 %v1465
    %v1467 = vpop.f32.mrb[0].mxu0
    %v1468 = vadd.f32 %v1388, %v1467
    %v1469 = vpop.f32.mrb[0].mxu0
    %v1470 = vadd.f32 %v1390, %v1469
    %1471 = vdwg.mxu0
    %v1472 = vand.u32 %v35, 4294901760
    %v1473 = vsub.f32 %v35, %v1472
    %v1474 = vand.u32 %v1473, 4294901760
    %1475 = vmatprep.subr.mxu0 %v1474
    %v1476 = vand.u32 %v34, 4294901760
    %v1477 = vsub.f32 %v34, %v1476
    %v1478 = vand.u32 %v1477, 4294901760
    %1479 = vmatpush1.msra.mxu0 %v1478
    %v1480 = vand.u32 %v43, 4294901760
    %v1481 = vsub.f32 %v43, %v1480
    %v1482 = vand.u32 %v1481, 4294901760
    %1483 = vmatprep.subr.mxu0 %v1482
    %v1484 = vand.u32 %v42, 4294901760
    %v1485 = vsub.f32 %v42, %v1484
    %v1486 = vand.u32 %v1485, 4294901760
    %1487 = vmatpush1.msra.mxu0 %v1486
    %v1488 = vand.u32 %v81, 4294901760
    %v1489 = vsub.f32 %v81, %v1488
    %v1490 = vand.u32 %v1489, 4294901760
    %1491 = vmatprep.subr.mxu0 %v1490
    %v1492 = vand.u32 %v78, 4294901760
    %v1493 = vsub.f32 %v78, %v1492
    %v1494 = vand.u32 %v1493, 4294901760
    %1495 = vmatpush1.msra.mxu0 %v1494
    %1496 = vmatprep.subr.mxu0 0.0
    %1497 = vmatpush1.msra.mxu0 0.0
    %1498 = vmatprep.subr.mxu0 0.0
    %1499 = vmatpush1.msra.mxu0 0.0
    %1500 = vmatprep.subr.mxu0 0.0
    %1501 = vmatpush1.msra.mxu0 0.0
    %1502 = vmatprep.subr.mxu0 0.0
    %1503 = vmatpush1.msra.mxu0 0.0
    %1504 = vmatprep.subr.mxu0 0.0
    %1505 = vmatpush1.msra.mxu0 0.0
    %1506 = vmatprep.subr.mxu0 0.0
    %1507 = vmatpush1.msra.mxu0 0.0
    %1508 = vmatprep.subr.mxu0 0.0
    %1509 = vmatpush1.msra.mxu0 0.0
    %1510 = vmatprep.subr.mxu0 0.0
    %1511 = vmatpush1.msra.mxu0 0.0
    %1512 = vmatprep.subr.mxu0 0.0
    %1513 = vmatpush1.msra.mxu0 0.0
    %1514 = vmatprep.subr.mxu0 0.0
    %1515 = vmatpush1.msra.mxu0 0.0
    %1516 = vmatprep.subr.mxu0 0.0
    %1517 = vmatpush1.msra.mxu0 0.0
    %1518 = vmatprep.subr.mxu0 0.0
    %1519 = vmatpush1.msra.mxu0 0.0
    %1520 = vmatprep.subr.mxu0 0.0
    %1521 = vmatpush1.msra.mxu0 0.0
    %1522 = vmatprep.subr.mxu0 0.0
    %1523 = vmatpush1.msra.mxu0 0.0
    %1524 = vmatprep.subr.mxu0 0.0
    %1525 = vmatpush1.msra.mxu0 0.0
    %1526 = vmatprep.subr.mxu0 0.0
    %1527 = vmatpush1.msra.mxu0 0.0
    %1528 = vmatprep.subr.mxu0 0.0
    %1529 = vmatpush1.msra.mxu0 0.0
    %1530 = vmatprep.subr.mxu0 0.0
    %1531 = vmatpush1.msra.mxu0 0.0
    %1532 = vmatprep.subr.mxu0 0.0
    %1533 = vmatpush1.msra.mxu0 0.0
    %1534 = vmatprep.subr.mxu0 0.0
    %1535 = vmatpush1.msra.mxu0 0.0
    %1536 = vmatprep.subr.mxu0 0.0
    %1537 = vmatpush1.msra.mxu0 0.0
    %1538 = vmatprep.subr.mxu0 0.0
    %1539 = vmatpush1.msra.mxu0 0.0
    %1540 = vmatprep.subr.mxu0 0.0
    %1541 = vmatpush1.msra.mxu0 0.0
    %1542 = vmatprep.subr.mxu0 0.0
    %1543 = vmatpush1.msra.mxu0 0.0
    %1544 = vmatprep.subr.mxu0 0.0
    %1545 = vmatpush1.msra.mxu0 0.0
    %1546 = vmatprep.subr.mxu0 0.0
    %1547 = vmatpush1.msra.mxu0 0.0
    %1548 = vmatprep.subr.mxu0 0.0
    %1549 = vmatpush1.msra.mxu0 0.0
    %1550 = vmatprep.subr.mxu0 0.0
    %1551 = vmatpush1.msra.mxu0 0.0
    %1552 = vmatprep.subr.mxu0 0.0
    %1553 = vmatpush1.msra.mxu0 0.0
    %1554 = vmatprep.mubr.f32.mxu0 0.0
    %v1555 = vand.u32 %v62, 4294901760
    %1556 = vmatmul.mubr.f32.gmra.mrb[0].mxu0 %v1555
    %v1557 = vpop.f32.mrb[0].mxu0
    %v1558 = vadd.f32 %v1468, %v1557
    %v1559 = vpop.f32.mrb[0].mxu0
    %v1560 = vadd.f32 %v1470, %v1559
    %1561 = vdwg.mxu0
    %v1562 = vand.u32 %v35, 4294901760
    %1563 = vmatprep.subr.mxu0 %v1562
    %v1564 = vand.u32 %v34, 4294901760
    %1565 = vmatpush1.msra.mxu0 %v1564
    %v1566 = vand.u32 %v43, 4294901760
    %1567 = vmatprep.subr.mxu0 %v1566
    %v1568 = vand.u32 %v42, 4294901760
    %1569 = vmatpush1.msra.mxu0 %v1568
    %v1570 = vand.u32 %v81, 4294901760
    %1571 = vmatprep.subr.mxu0 %v1570
    %v1572 = vand.u32 %v78, 4294901760
    %1573 = vmatpush1.msra.mxu0 %v1572
    %1574 = vmatprep.subr.mxu0 0.0
    %1575 = vmatpush1.msra.mxu0 0.0
    %1576 = vmatprep.subr.mxu0 0.0
    %1577 = vmatpush1.msra.mxu0 0.0
    %1578 = vmatprep.subr.mxu0 0.0
    %1579 = vmatpush1.msra.mxu0 0.0
    %1580 = vmatprep.subr.mxu0 0.0
    %1581 = vmatpush1.msra.mxu0 0.0
    %1582 = vmatprep.subr.mxu0 0.0
    %1583 = vmatpush1.msra.mxu0 0.0
    %1584 = vmatprep.subr.mxu0 0.0
    %1585 = vmatpush1.msra.mxu0 0.0
    %1586 = vmatprep.subr.mxu0 0.0
    %1587 = vmatpush1.msra.mxu0 0.0
    %1588 = vmatprep.subr.mxu0 0.0
    %1589 = vmatpush1.msra.mxu0 0.0
    %1590 = vmatprep.subr.mxu0 0.0
    %1591 = vmatpush1.msra.mxu0 0.0
    %1592 = vmatprep.subr.mxu0 0.0
    %1593 = vmatpush1.msra.mxu0 0.0
    %1594 = vmatprep.subr.mxu0 0.0
    %1595 = vmatpush1.msra.mxu0 0.0
    %1596 = vmatprep.subr.mxu0 0.0
    %1597 = vmatpush1.msra.mxu0 0.0
    %1598 = vmatprep.subr.mxu0 0.0
    %1599 = vmatpush1.msra.mxu0 0.0
    %1600 = vmatprep.subr.mxu0 0.0
    %1601 = vmatpush1.msra.mxu0 0.0
    %1602 = vmatprep.subr.mxu0 0.0
    %1603 = vmatpush1.msra.mxu0 0.0
    %1604 = vmatprep.subr.mxu0 0.0
    %1605 = vmatpush1.msra.mxu0 0.0
    %1606 = vmatprep.subr.mxu0 0.0
    %1607 = vmatpush1.msra.mxu0 0.0
    %1608 = vmatprep.subr.mxu0 0.0
    %1609 = vmatpush1.msra.mxu0 0.0
    %1610 = vmatprep.subr.mxu0 0.0
    %1611 = vmatpush1.msra.mxu0 0.0
    %1612 = vmatprep.subr.mxu0 0.0
    %1613 = vmatpush1.msra.mxu0 0.0
    %1614 = vmatprep.subr.mxu0 0.0
    %1615 = vmatpush1.msra.mxu0 0.0
    %1616 = vmatprep.subr.mxu0 0.0
    %1617 = vmatpush1.msra.mxu0 0.0
    %1618 = vmatprep.subr.mxu0 0.0
    %1619 = vmatpush1.msra.mxu0 0.0
    %1620 = vmatprep.subr.mxu0 0.0
    %1621 = vmatpush1.msra.mxu0 0.0
    %1622 = vmatprep.subr.mxu0 0.0
    %1623 = vmatpush1.msra.mxu0 0.0
    %1624 = vmatprep.subr.mxu0 0.0
    %1625 = vmatpush1.msra.mxu0 0.0
    %1626 = vmatprep.subr.mxu0 0.0
    %1627 = vmatpush1.msra.mxu0 0.0
    %1628 = vmatprep.subr.mxu0 0.0
    %1629 = vmatpush1.msra.mxu0 0.0
    %1630 = vmatprep.subr.mxu0 0.0
    %1631 = vmatpush1.msra.mxu0 0.0
    %1632 = vmatprep.mubr.f32.mxu0 0.0
    %v1633 = vand.u32 %v62, 4294901760
    %1634 = vmatmul.mubr.f32.gmra.mrb[0].mxu0 %v1633
    %v1635 = vpop.f32.mrb[0].mxu0
    %v1636 = vadd.f32 %v1558, %v1635
    %v1637 = vpop.f32.mrb[0].mxu0
    %v1638 = vadd.f32 %v1560, %v1637
    %1639 = vdwg.mxu0
    %v1640 = vand.u32 %v37, 4294901760
    %1641 = vmatprep.subr.mxu0 %v1640
    %v1642 = vand.u32 %v36, 4294901760
    %1643 = vmatpush1.msra.mxu0 %v1642
    %v1644 = vand.u32 %v45, 4294901760
    %1645 = vmatprep.subr.mxu0 %v1644
    %v1646 = vand.u32 %v44, 4294901760
    %1647 = vmatpush1.msra.mxu0 %v1646
    %v1648 = vand.u32 %v87, 4294901760
    %1649 = vmatprep.subr.mxu0 %v1648
    %v1650 = vand.u32 %v84, 4294901760
    %1651 = vmatpush1.msra.mxu0 %v1650
    %1652 = vmatprep.subr.mxu0 0.0
    %1653 = vmatpush1.msra.mxu0 0.0
    %1654 = vmatprep.subr.mxu0 0.0
    %1655 = vmatpush1.msra.mxu0 0.0
    %1656 = vmatprep.subr.mxu0 0.0
    %1657 = vmatpush1.msra.mxu0 0.0
    %1658 = vmatprep.subr.mxu0 0.0
    %1659 = vmatpush1.msra.mxu0 0.0
    %1660 = vmatprep.subr.mxu0 0.0
    %1661 = vmatpush1.msra.mxu0 0.0
    %1662 = vmatprep.subr.mxu0 0.0
    %1663 = vmatpush1.msra.mxu0 0.0
    %1664 = vmatprep.subr.mxu0 0.0
    %1665 = vmatpush1.msra.mxu0 0.0
    %1666 = vmatprep.subr.mxu0 0.0
    %1667 = vmatpush1.msra.mxu0 0.0
    %1668 = vmatprep.subr.mxu0 0.0
    %1669 = vmatpush1.msra.mxu0 0.0
    %1670 = vmatprep.subr.mxu0 0.0
    %1671 = vmatpush1.msra.mxu0 0.0
    %1672 = vmatprep.subr.mxu0 0.0
    %1673 = vmatpush1.msra.mxu0 0.0
    %1674 = vmatprep.subr.mxu0 0.0
    %1675 = vmatpush1.msra.mxu0 0.0
    %1676 = vmatprep.subr.mxu0 0.0
    %1677 = vmatpush1.msra.mxu0 0.0
    %1678 = vmatprep.subr.mxu0 0.0
    %1679 = vmatpush1.msra.mxu0 0.0
    %1680 = vmatprep.subr.mxu0 0.0
    %1681 = vmatpush1.msra.mxu0 0.0
    %1682 = vmatprep.subr.mxu0 0.0
    %1683 = vmatpush1.msra.mxu0 0.0
    %1684 = vmatprep.subr.mxu0 0.0
    %1685 = vmatpush1.msra.mxu0 0.0
    %1686 = vmatprep.subr.mxu0 0.0
    %1687 = vmatpush1.msra.mxu0 0.0
    %1688 = vmatprep.subr.mxu0 0.0
    %1689 = vmatpush1.msra.mxu0 0.0
    %1690 = vmatprep.subr.mxu0 0.0
    %1691 = vmatpush1.msra.mxu0 0.0
    %1692 = vmatprep.subr.mxu0 0.0
    %1693 = vmatpush1.msra.mxu0 0.0
    %1694 = vmatprep.subr.mxu0 0.0
    %1695 = vmatpush1.msra.mxu0 0.0
    %1696 = vmatprep.subr.mxu0 0.0
    %1697 = vmatpush1.msra.mxu0 0.0
    %1698 = vmatprep.subr.mxu0 0.0
    %1699 = vmatpush1.msra.mxu0 0.0
    %1700 = vmatprep.subr.mxu0 0.0
    %1701 = vmatpush1.msra.mxu0 0.0
    %1702 = vmatprep.subr.mxu0 0.0
    %1703 = vmatpush1.msra.mxu0 0.0
    %1704 = vmatprep.subr.mxu0 0.0
    %1705 = vmatpush1.msra.mxu0 0.0
    %1706 = vmatprep.subr.mxu0 0.0
    %1707 = vmatpush1.msra.mxu0 0.0
    %1708 = vmatprep.subr.mxu0 0.0
    %1709 = vmatpush1.msra.mxu0 0.0
    %1710 = vmatprep.mubr.f32.mxu0 0.0
    %v1711 = vand.u32 %v62, 4294901760
    %v1712 = vsub.f32 %v62, %v1711
    %v1713 = vand.u32 %v1712, 4294901760
    %v1714 = vsub.f32 %v1712, %v1713
    %v1715 = vand.u32 %v1714, 4294901760
    %1716 = vmatmul.mubr.f32.gmra.mrb[0].mxu0 %v1715
    %v1717 = vpop.f32.mrb[0].mxu0
    %v1718 = vadd.f32 %v58, %v1717
    %v1719 = vpop.f32.mrb[0].mxu0
    %v1720 = vadd.f32 %v58, %v1719
    %1721 = vdwg.mxu0
    %v1722 = vand.u32 %v37, 4294901760
    %v1723 = vsub.f32 %v37, %v1722
    %v1724 = vand.u32 %v1723, 4294901760
    %v1725 = vsub.f32 %v1723, %v1724
    %v1726 = vand.u32 %v1725, 4294901760
    %1727 = vmatprep.subr.mxu0 %v1726
    %v1728 = vand.u32 %v36, 4294901760
    %v1729 = vsub.f32 %v36, %v1728
    %v1730 = vand.u32 %v1729, 4294901760
    %v1731 = vsub.f32 %v1729, %v1730
    %v1732 = vand.u32 %v1731, 4294901760
    %1733 = vmatpush1.msra.mxu0 %v1732
    %v1734 = vand.u32 %v45, 4294901760
    %v1735 = vsub.f32 %v45, %v1734
    %v1736 = vand.u32 %v1735, 4294901760
    %v1737 = vsub.f32 %v1735, %v1736
    %v1738 = vand.u32 %v1737, 4294901760
    %1739 = vmatprep.subr.mxu0 %v1738
    %v1740 = vand.u32 %v44, 4294901760
    %v1741 = vsub.f32 %v44, %v1740
    %v1742 = vand.u32 %v1741, 4294901760
    %v1743 = vsub.f32 %v1741, %v1742
    %v1744 = vand.u32 %v1743, 4294901760
    %1745 = vmatpush1.msra.mxu0 %v1744
    %v1746 = vand.u32 %v87, 4294901760
    %v1747 = vsub.f32 %v87, %v1746
    %v1748 = vand.u32 %v1747, 4294901760
    %v1749 = vsub.f32 %v1747, %v1748
    %v1750 = vand.u32 %v1749, 4294901760
    %1751 = vmatprep.subr.mxu0 %v1750
    %v1752 = vand.u32 %v84, 4294901760
    %v1753 = vsub.f32 %v84, %v1752
    %v1754 = vand.u32 %v1753, 4294901760
    %v1755 = vsub.f32 %v1753, %v1754
    %v1756 = vand.u32 %v1755, 4294901760
    %1757 = vmatpush1.msra.mxu0 %v1756
    %1758 = vmatprep.subr.mxu0 0.0
    %1759 = vmatpush1.msra.mxu0 0.0
    %1760 = vmatprep.subr.mxu0 0.0
    %1761 = vmatpush1.msra.mxu0 0.0
    %1762 = vmatprep.subr.mxu0 0.0
    %1763 = vmatpush1.msra.mxu0 0.0
    %1764 = vmatprep.subr.mxu0 0.0
    %1765 = vmatpush1.msra.mxu0 0.0
    %1766 = vmatprep.subr.mxu0 0.0
    %1767 = vmatpush1.msra.mxu0 0.0
    %1768 = vmatprep.subr.mxu0 0.0
    %1769 = vmatpush1.msra.mxu0 0.0
    %1770 = vmatprep.subr.mxu0 0.0
    %1771 = vmatpush1.msra.mxu0 0.0
    %1772 = vmatprep.subr.mxu0 0.0
    %1773 = vmatpush1.msra.mxu0 0.0
    %1774 = vmatprep.subr.mxu0 0.0
    %1775 = vmatpush1.msra.mxu0 0.0
    %1776 = vmatprep.subr.mxu0 0.0
    %1777 = vmatpush1.msra.mxu0 0.0
    %1778 = vmatprep.subr.mxu0 0.0
    %1779 = vmatpush1.msra.mxu0 0.0
    %1780 = vmatprep.subr.mxu0 0.0
    %1781 = vmatpush1.msra.mxu0 0.0
    %1782 = vmatprep.subr.mxu0 0.0
    %1783 = vmatpush1.msra.mxu0 0.0
    %1784 = vmatprep.subr.mxu0 0.0
    %1785 = vmatpush1.msra.mxu0 0.0
    %1786 = vmatprep.subr.mxu0 0.0
    %1787 = vmatpush1.msra.mxu0 0.0
    %1788 = vmatprep.subr.mxu0 0.0
    %1789 = vmatpush1.msra.mxu0 0.0
    %1790 = vmatprep.subr.mxu0 0.0
    %1791 = vmatpush1.msra.mxu0 0.0
    %1792 = vmatprep.subr.mxu0 0.0
    %1793 = vmatpush1.msra.mxu0 0.0
    %1794 = vmatprep.subr.mxu0 0.0
    %1795 = vmatpush1.msra.mxu0 0.0
    %1796 = vmatprep.subr.mxu0 0.0
    %1797 = vmatpush1.msra.mxu0 0.0
    %1798 = vmatprep.subr.mxu0 0.0
    %1799 = vmatpush1.msra.mxu0 0.0
    %1800 = vmatprep.subr.mxu0 0.0
    %1801 = vmatpush1.msra.mxu0 0.0
    %1802 = vmatprep.subr.mxu0 0.0
    %1803 = vmatpush1.msra.mxu0 0.0
    %1804 = vmatprep.subr.mxu0 0.0
    %1805 = vmatpush1.msra.mxu0 0.0
    %1806 = vmatprep.subr.mxu0 0.0
    %1807 = vmatpush1.msra.mxu0 0.0
    %1808 = vmatprep.subr.mxu0 0.0
    %1809 = vmatpush1.msra.mxu0 0.0
    %1810 = vmatprep.subr.mxu0 0.0
    %1811 = vmatpush1.msra.mxu0 0.0
    %1812 = vmatprep.subr.mxu0 0.0
    %1813 = vmatpush1.msra.mxu0 0.0
    %1814 = vmatprep.subr.mxu0 0.0
    %1815 = vmatpush1.msra.mxu0 0.0
    %1816 = vmatprep.mubr.f32.mxu0 0.0
    %v1817 = vand.u32 %v62, 4294901760
    %1818 = vmatmul.mubr.f32.gmra.mrb[0].mxu0 %v1817
    %v1819 = vpop.f32.mrb[0].mxu0
    %v1820 = vadd.f32 %v1718, %v1819
    %v1821 = vpop.f32.mrb[0].mxu0
    %v1822 = vadd.f32 %v1720, %v1821
    %1823 = vdwg.mxu0
    %v1824 = vand.u32 %v37, 4294901760
    %v1825 = vsub.f32 %v37, %v1824
    %1826 = vmatprep.subr.mxu0 %v1825
    %v1827 = vand.u32 %v36, 4294901760
    %v1828 = vsub.f32 %v36, %v1827
    %1829 = vmatpush1.msra.mxu0 %v1828
    %v1830 = vand.u32 %v45, 4294901760
    %v1831 = vsub.f32 %v45, %v1830
    %1832 = vmatprep.subr.mxu0 %v1831
    %v1833 = vand.u32 %v44, 4294901760
    %v1834 = vsub.f32 %v44, %v1833
    %1835 = vmatpush1.msra.mxu0 %v1834
    %v1836 = vand.u32 %v87, 4294901760
    %v1837 = vsub.f32 %v87, %v1836
    %1838 = vmatprep.subr.mxu0 %v1837
    %v1839 = vand.u32 %v84, 4294901760
    %v1840 = vsub.f32 %v84, %v1839
    %1841 = vmatpush1.msra.mxu0 %v1840
    %1842 = vmatprep.subr.mxu0 0.0
    %1843 = vmatpush1.msra.mxu0 0.0
    %1844 = vmatprep.subr.mxu0 0.0
    %1845 = vmatpush1.msra.mxu0 0.0
    %1846 = vmatprep.subr.mxu0 0.0
    %1847 = vmatpush1.msra.mxu0 0.0
    %1848 = vmatprep.subr.mxu0 0.0
    %1849 = vmatpush1.msra.mxu0 0.0
    %1850 = vmatprep.subr.mxu0 0.0
    %1851 = vmatpush1.msra.mxu0 0.0
    %1852 = vmatprep.subr.mxu0 0.0
    %1853 = vmatpush1.msra.mxu0 0.0
    %1854 = vmatprep.subr.mxu0 0.0
    %1855 = vmatpush1.msra.mxu0 0.0
    %1856 = vmatprep.subr.mxu0 0.0
    %1857 = vmatpush1.msra.mxu0 0.0
    %1858 = vmatprep.subr.mxu0 0.0
    %1859 = vmatpush1.msra.mxu0 0.0
    %1860 = vmatprep.subr.mxu0 0.0
    %1861 = vmatpush1.msra.mxu0 0.0
    %1862 = vmatprep.subr.mxu0 0.0
    %1863 = vmatpush1.msra.mxu0 0.0
    %1864 = vmatprep.subr.mxu0 0.0
    %1865 = vmatpush1.msra.mxu0 0.0
    %1866 = vmatprep.subr.mxu0 0.0
    %1867 = vmatpush1.msra.mxu0 0.0
    %1868 = vmatprep.subr.mxu0 0.0
    %1869 = vmatpush1.msra.mxu0 0.0
    %1870 = vmatprep.subr.mxu0 0.0
    %1871 = vmatpush1.msra.mxu0 0.0
    %1872 = vmatprep.subr.mxu0 0.0
    %1873 = vmatpush1.msra.mxu0 0.0
    %1874 = vmatprep.subr.mxu0 0.0
    %1875 = vmatpush1.msra.mxu0 0.0
    %1876 = vmatprep.subr.mxu0 0.0
    %1877 = vmatpush1.msra.mxu0 0.0
    %1878 = vmatprep.subr.mxu0 0.0
    %1879 = vmatpush1.msra.mxu0 0.0
    %1880 = vmatprep.subr.mxu0 0.0
    %1881 = vmatpush1.msra.mxu0 0.0
    %1882 = vmatprep.subr.mxu0 0.0
    %1883 = vmatpush1.msra.mxu0 0.0
    %1884 = vmatprep.subr.mxu0 0.0
    %1885 = vmatpush1.msra.mxu0 0.0
    %1886 = vmatprep.subr.mxu0 0.0
    %1887 = vmatpush1.msra.mxu0 0.0
    %1888 = vmatprep.subr.mxu0 0.0
    %1889 = vmatpush1.msra.mxu0 0.0
    %1890 = vmatprep.subr.mxu0 0.0
    %1891 = vmatpush1.msra.mxu0 0.0
    %1892 = vmatprep.subr.mxu0 0.0
    %1893 = vmatpush1.msra.mxu0 0.0
    %1894 = vmatprep.subr.mxu0 0.0
    %1895 = vmatpush1.msra.mxu0 0.0
    %1896 = vmatprep.subr.mxu0 0.0
    %1897 = vmatpush1.msra.mxu0 0.0
    %1898 = vmatprep.subr.mxu0 0.0
    %1899 = vmatpush1.msra.mxu0 0.0
    %1900 = vmatprep.mubr.f32.mxu0 0.0
    %v1901 = vand.u32 %v62, 4294901760
    %v1902 = vsub.f32 %v62, %v1901
    %1903 = vmatmul.mubr.f32.gmra.mrb[0].mxu0 %v1902
    %v1904 = vpop.f32.mrb[0].mxu0
    %v1905 = vadd.f32 %v1820, %v1904
    %v1906 = vpop.f32.mrb[0].mxu0
    %v1907 = vadd.f32 %v1822, %v1906
    %1908 = vdwg.mxu0
    %v1909 = vand.u32 %v37, 4294901760
    %1910 = vmatprep.subr.mxu0 %v1909
    %v1911 = vand.u32 %v36, 4294901760
    %1912 = vmatpush1.msra.mxu0 %v1911
    %v1913 = vand.u32 %v45, 4294901760
    %1914 = vmatprep.subr.mxu0 %v1913
    %v1915 = vand.u32 %v44, 4294901760
    %1916 = vmatpush1.msra.mxu0 %v1915
    %v1917 = vand.u32 %v87, 4294901760
    %1918 = vmatprep.subr.mxu0 %v1917
    %v1919 = vand.u32 %v84, 4294901760
    %1920 = vmatpush1.msra.mxu0 %v1919
    %1921 = vmatprep.subr.mxu0 0.0
    %1922 = vmatpush1.msra.mxu0 0.0
    %1923 = vmatprep.subr.mxu0 0.0
    %1924 = vmatpush1.msra.mxu0 0.0
    %1925 = vmatprep.subr.mxu0 0.0
    %1926 = vmatpush1.msra.mxu0 0.0
    %1927 = vmatprep.subr.mxu0 0.0
    %1928 = vmatpush1.msra.mxu0 0.0
    %1929 = vmatprep.subr.mxu0 0.0
    %1930 = vmatpush1.msra.mxu0 0.0
    %1931 = vmatprep.subr.mxu0 0.0
    %1932 = vmatpush1.msra.mxu0 0.0
    %1933 = vmatprep.subr.mxu0 0.0
    %1934 = vmatpush1.msra.mxu0 0.0
    %1935 = vmatprep.subr.mxu0 0.0
    %1936 = vmatpush1.msra.mxu0 0.0
    %1937 = vmatprep.subr.mxu0 0.0
    %1938 = vmatpush1.msra.mxu0 0.0
    %1939 = vmatprep.subr.mxu0 0.0
    %1940 = vmatpush1.msra.mxu0 0.0
    %1941 = vmatprep.subr.mxu0 0.0
    %1942 = vmatpush1.msra.mxu0 0.0
    %1943 = vmatprep.subr.mxu0 0.0
    %1944 = vmatpush1.msra.mxu0 0.0
    %1945 = vmatprep.subr.mxu0 0.0
    %1946 = vmatpush1.msra.mxu0 0.0
    %1947 = vmatprep.subr.mxu0 0.0
    %1948 = vmatpush1.msra.mxu0 0.0
    %1949 = vmatprep.subr.mxu0 0.0
    %1950 = vmatpush1.msra.mxu0 0.0
    %1951 = vmatprep.subr.mxu0 0.0
    %1952 = vmatpush1.msra.mxu0 0.0
    %1953 = vmatprep.subr.mxu0 0.0
    %1954 = vmatpush1.msra.mxu0 0.0
    %1955 = vmatprep.subr.mxu0 0.0
    %1956 = vmatpush1.msra.mxu0 0.0
    %1957 = vmatprep.subr.mxu0 0.0
    %1958 = vmatpush1.msra.mxu0 0.0
    %1959 = vmatprep.subr.mxu0 0.0
    %1960 = vmatpush1.msra.mxu0 0.0
    %1961 = vmatprep.subr.mxu0 0.0
    %1962 = vmatpush1.msra.mxu0 0.0
    %1963 = vmatprep.subr.mxu0 0.0
    %1964 = vmatpush1.msra.mxu0 0.0
    %1965 = vmatprep.subr.mxu0 0.0
    %1966 = vmatpush1.msra.mxu0 0.0
    %1967 = vmatprep.subr.mxu0 0.0
    %1968 = vmatpush1.msra.mxu0 0.0
    %1969 = vmatprep.subr.mxu0 0.0
    %1970 = vmatpush1.msra.mxu0 0.0
    %1971 = vmatprep.subr.mxu0 0.0
    %1972 = vmatpush1.msra.mxu0 0.0
    %1973 = vmatprep.subr.mxu0 0.0
    %1974 = vmatpush1.msra.mxu0 0.0
    %1975 = vmatprep.subr.mxu0 0.0
    %1976 = vmatpush1.msra.mxu0 0.0
    %1977 = vmatprep.subr.mxu0 0.0
    %1978 = vmatpush1.msra.mxu0 0.0
    %1979 = vmatprep.mubr.f32.mxu0 0.0
    %v1980 = vand.u32 %v62, 4294901760
    %v1981 = vsub.f32 %v62, %v1980
    %v1982 = vand.u32 %v1981, 4294901760
    %1983 = vmatmul.mubr.f32.gmra.mrb[0].mxu0 %v1982
    %v1984 = vpop.f32.mrb[0].mxu0
    %v1985 = vadd.f32 %v1905, %v1984
    %v1986 = vpop.f32.mrb[0].mxu0
    %v1987 = vadd.f32 %v1907, %v1986
    %1988 = vdwg.mxu0
    %v1989 = vand.u32 %v37, 4294901760
    %v1990 = vsub.f32 %v37, %v1989
    %v1991 = vand.u32 %v1990, 4294901760
    %1992 = vmatprep.subr.mxu0 %v1991
    %v1993 = vand.u32 %v36, 4294901760
    %v1994 = vsub.f32 %v36, %v1993
    %v1995 = vand.u32 %v1994, 4294901760
    %1996 = vmatpush1.msra.mxu0 %v1995
    %v1997 = vand.u32 %v45, 4294901760
    %v1998 = vsub.f32 %v45, %v1997
    %v1999 = vand.u32 %v1998, 4294901760
    %2000 = vmatprep.subr.mxu0 %v1999
    %v2001 = vand.u32 %v44, 4294901760
    %v2002 = vsub.f32 %v44, %v2001
    %v2003 = vand.u32 %v2002, 4294901760
    %2004 = vmatpush1.msra.mxu0 %v2003
    %v2005 = vand.u32 %v87, 4294901760
    %v2006 = vsub.f32 %v87, %v2005
    %v2007 = vand.u32 %v2006, 4294901760
    %2008 = vmatprep.subr.mxu0 %v2007
    %v2009 = vand.u32 %v84, 4294901760
    %v2010 = vsub.f32 %v84, %v2009
    %v2011 = vand.u32 %v2010, 4294901760
    %2012 = vmatpush1.msra.mxu0 %v2011
    %2013 = vmatprep.subr.mxu0 0.0
    %2014 = vmatpush1.msra.mxu0 0.0
    %2015 = vmatprep.subr.mxu0 0.0
    %2016 = vmatpush1.msra.mxu0 0.0
    %2017 = vmatprep.subr.mxu0 0.0
    %2018 = vmatpush1.msra.mxu0 0.0
    %2019 = vmatprep.subr.mxu0 0.0
    %2020 = vmatpush1.msra.mxu0 0.0
    %2021 = vmatprep.subr.mxu0 0.0
    %2022 = vmatpush1.msra.mxu0 0.0
    %2023 = vmatprep.subr.mxu0 0.0
    %2024 = vmatpush1.msra.mxu0 0.0
    %2025 = vmatprep.subr.mxu0 0.0
    %2026 = vmatpush1.msra.mxu0 0.0
    %2027 = vmatprep.subr.mxu0 0.0
    %2028 = vmatpush1.msra.mxu0 0.0
    %2029 = vmatprep.subr.mxu0 0.0
    %2030 = vmatpush1.msra.mxu0 0.0
    %2031 = vmatprep.subr.mxu0 0.0
    %2032 = vmatpush1.msra.mxu0 0.0
    %2033 = vmatprep.subr.mxu0 0.0
    %2034 = vmatpush1.msra.mxu0 0.0
    %2035 = vmatprep.subr.mxu0 0.0
    %2036 = vmatpush1.msra.mxu0 0.0
    %2037 = vmatprep.subr.mxu0 0.0
    %2038 = vmatpush1.msra.mxu0 0.0
    %2039 = vmatprep.subr.mxu0 0.0
    %2040 = vmatpush1.msra.mxu0 0.0
    %2041 = vmatprep.subr.mxu0 0.0
    %2042 = vmatpush1.msra.mxu0 0.0
    %2043 = vmatprep.subr.mxu0 0.0
    %2044 = vmatpush1.msra.mxu0 0.0
    %2045 = vmatprep.subr.mxu0 0.0
    %2046 = vmatpush1.msra.mxu0 0.0
    %2047 = vmatprep.subr.mxu0 0.0
    %2048 = vmatpush1.msra.mxu0 0.0
    %2049 = vmatprep.subr.mxu0 0.0
    %2050 = vmatpush1.msra.mxu0 0.0
    %2051 = vmatprep.subr.mxu0 0.0
    %2052 = vmatpush1.msra.mxu0 0.0
    %2053 = vmatprep.subr.mxu0 0.0
    %2054 = vmatpush1.msra.mxu0 0.0
    %2055 = vmatprep.subr.mxu0 0.0
    %2056 = vmatpush1.msra.mxu0 0.0
    %2057 = vmatprep.subr.mxu0 0.0
    %2058 = vmatpush1.msra.mxu0 0.0
    %2059 = vmatprep.subr.mxu0 0.0
    %2060 = vmatpush1.msra.mxu0 0.0
    %2061 = vmatprep.subr.mxu0 0.0
    %2062 = vmatpush1.msra.mxu0 0.0
    %2063 = vmatprep.subr.mxu0 0.0
    %2064 = vmatpush1.msra.mxu0 0.0
    %2065 = vmatprep.subr.mxu0 0.0
    %2066 = vmatpush1.msra.mxu0 0.0
    %2067 = vmatprep.subr.mxu0 0.0
    %2068 = vmatpush1.msra.mxu0 0.0
    %2069 = vmatprep.subr.mxu0 0.0
    %2070 = vmatpush1.msra.mxu0 0.0
    %2071 = vmatprep.mubr.f32.mxu0 0.0
    %v2072 = vand.u32 %v62, 4294901760
    %2073 = vmatmul.mubr.f32.gmra.mrb[0].mxu0 %v2072
    %v2074 = vpop.f32.mrb[0].mxu0
    %v2075 = vadd.f32 %v1985, %v2074
    %v2076 = vpop.f32.mrb[0].mxu0
    %v2077 = vadd.f32 %v1987, %v2076
    %2078 = vdwg.mxu0
    %v2079 = vand.u32 %v37, 4294901760
    %2080 = vmatprep.subr.mxu0 %v2079
    %v2081 = vand.u32 %v36, 4294901760
    %2082 = vmatpush1.msra.mxu0 %v2081
    %v2083 = vand.u32 %v45, 4294901760
    %2084 = vmatprep.subr.mxu0 %v2083
    %v2085 = vand.u32 %v44, 4294901760
    %2086 = vmatpush1.msra.mxu0 %v2085
    %v2087 = vand.u32 %v87, 4294901760
    %2088 = vmatprep.subr.mxu0 %v2087
    %v2089 = vand.u32 %v84, 4294901760
    %2090 = vmatpush1.msra.mxu0 %v2089
    %2091 = vmatprep.subr.mxu0 0.0
    %2092 = vmatpush1.msra.mxu0 0.0
    %2093 = vmatprep.subr.mxu0 0.0
    %2094 = vmatpush1.msra.mxu0 0.0
    %2095 = vmatprep.subr.mxu0 0.0
    %2096 = vmatpush1.msra.mxu0 0.0
    %2097 = vmatprep.subr.mxu0 0.0
    %2098 = vmatpush1.msra.mxu0 0.0
    %2099 = vmatprep.subr.mxu0 0.0
    %2100 = vmatpush1.msra.mxu0 0.0
    %2101 = vmatprep.subr.mxu0 0.0
    %2102 = vmatpush1.msra.mxu0 0.0
    %2103 = vmatprep.subr.mxu0 0.0
    %2104 = vmatpush1.msra.mxu0 0.0
    %2105 = vmatprep.subr.mxu0 0.0
    %2106 = vmatpush1.msra.mxu0 0.0
    %2107 = vmatprep.subr.mxu0 0.0
    %2108 = vmatpush1.msra.mxu0 0.0
    %2109 = vmatprep.subr.mxu0 0.0
    %2110 = vmatpush1.msra.mxu0 0.0
    %2111 = vmatprep.subr.mxu0 0.0
    %2112 = vmatpush1.msra.mxu0 0.0
    %2113 = vmatprep.subr.mxu0 0.0
    %2114 = vmatpush1.msra.mxu0 0.0
    %2115 = vmatprep.subr.mxu0 0.0
    %2116 = vmatpush1.msra.mxu0 0.0
    %2117 = vmatprep.subr.mxu0 0.0
    %2118 = vmatpush1.msra.mxu0 0.0
    %2119 = vmatprep.subr.mxu0 0.0
    %2120 = vmatpush1.msra.mxu0 0.0
    %2121 = vmatprep.subr.mxu0 0.0
    %2122 = vmatpush1.msra.mxu0 0.0
    %2123 = vmatprep.subr.mxu0 0.0
    %2124 = vmatpush1.msra.mxu0 0.0
    %2125 = vmatprep.subr.mxu0 0.0
    %2126 = vmatpush1.msra.mxu0 0.0
    %2127 = vmatprep.subr.mxu0 0.0
    %2128 = vmatpush1.msra.mxu0 0.0
    %2129 = vmatprep.subr.mxu0 0.0
    %2130 = vmatpush1.msra.mxu0 0.0
    %2131 = vmatprep.subr.mxu0 0.0
    %2132 = vmatpush1.msra.mxu0 0.0
    %2133 = vmatprep.subr.mxu0 0.0
    %2134 = vmatpush1.msra.mxu0 0.0
    %2135 = vmatprep.subr.mxu0 0.0
    %2136 = vmatpush1.msra.mxu0 0.0
    %2137 = vmatprep.subr.mxu0 0.0
    %2138 = vmatpush1.msra.mxu0 0.0
    %2139 = vmatprep.subr.mxu0 0.0
    %2140 = vmatpush1.msra.mxu0 0.0
    %2141 = vmatprep.subr.mxu0 0.0
    %2142 = vmatpush1.msra.mxu0 0.0
    %2143 = vmatprep.subr.mxu0 0.0
    %2144 = vmatpush1.msra.mxu0 0.0
    %2145 = vmatprep.subr.mxu0 0.0
    %2146 = vmatpush1.msra.mxu0 0.0
    %2147 = vmatprep.subr.mxu0 0.0
    %2148 = vmatpush1.msra.mxu0 0.0
    %2149 = vmatprep.mubr.f32.mxu0 0.0
    %v2150 = vand.u32 %v62, 4294901760
    %2151 = vmatmul.mubr.f32.gmra.mrb[0].mxu0 %v2150
    %v2152 = vpop.f32.mrb[0].mxu0
    %v2153 = vadd.f32 %v2075, %v2152
    %v2154 = vpop.f32.mrb[0].mxu0
    %v2155 = vadd.f32 %v2077, %v2154
    %2156 = vdwg.mxu0
    %v2157 = vxor.u32 %v602, 2147483648
    %v2158 = vxor.u32 %v604, 2147483648
    %v2159 = vxor.u32 %v1119, 2147483648
    %v2160 = vxor.u32 %v1121, 2147483648
    %v2161 = vxor.u32 %v1636, 2147483648
    %v2162 = vxor.u32 %v1638, 2147483648
    %v2163 = vxor.u32 %v2153, 2147483648
    %v2164 = vxor.u32 %v2155, 2147483648
    %v2165 = vmul.f32 %v2157, 1.442695
    %v2166 = vpow.pop %v2165
    %v2167 = vmul.f32 %v2158, 1.442695
    %v2168 = vpow.pop %v2167
    %v2169 = vmul.f32 %v2159, 1.442695
    %v2170 = vpow.pop %v2169
    %v2171 = vmul.f32 %v2160, 1.442695
    %v2172 = vpow.pop %v2171
    %v2173 = vmul.f32 %v2161, 1.442695
    %v2174 = vpow.pop %v2173
    %v2175 = vmul.f32 %v2162, 1.442695
    %v2176 = vpow.pop %v2175
    %v2177 = vmul.f32 %v2163, 1.442695
    %v2178 = vpow.pop %v2177
    %v2179 = vmul.f32 %v2164, 1.442695
    %v2180 = vpow.pop %v2179
    %v2181 = vadd.f32 %v2166, 1.0
    %v2182 = vadd.f32 %v2168, 1.0
    %v2183 = vadd.f32 %v2170, 1.0
    %v2184 = vadd.f32 %v2172, 1.0
    %v2185 = vadd.f32 %v2174, 1.0
    %v2186 = vadd.f32 %v2176, 1.0
    %v2187 = vadd.f32 %v2178, 1.0
    %v2188 = vadd.f32 %v2180, 1.0
    %v2189 = vrcp.pop %v2181
    %v2190 = vmul.f32 1.0, %v2189
    %v2191 = vrcp.pop %v2182
    %v2192 = vmul.f32 1.0, %v2191
    %v2193 = vrcp.pop %v2183
    %v2194 = vmul.f32 1.0, %v2193
    %v2195 = vrcp.pop %v2184
    %v2196 = vmul.f32 1.0, %v2195
    %v2197 = vrcp.pop %v2185
    %v2198 = vmul.f32 1.0, %v2197
    %v2199 = vrcp.pop %v2186
    %v2200 = vmul.f32 1.0, %v2199
    %v2201 = vrcp.pop %v2187
    %v2202 = vmul.f32 1.0, %v2201
    %v2203 = vrcp.pop %v2188
    %v2204 = vmul.f32 1.0, %v2203
    %2205 = vst [vmem:[#allocation5] sm:$0x1f] %v2190
    %2206 = vst [vmem:[#allocation5 + $0x8] sm:$0x1f] %v2192
    %2207 = vst [vmem:[#allocation5 + $0x10] sm:$0x1f] %v2194
    %2208 = vst [vmem:[#allocation5 + $0x18] sm:$0x1f] %v2196
    %2209 = vst [vmem:[#allocation5 + $0x20] sm:$0x1f] %v2198
    %2210 = vst [vmem:[#allocation5 + $0x28] sm:$0x1f] %v2200
    %2211 = vst [vmem:[#allocation5 + $0x30] sm:$0x1f] %v2202
    %vm2212 = vcmask 233472
    %2213 = vst.msk [vmem:[#allocation5 + $0x38] sm:$0x1f] %vm2212, %v2204
    // Predicated region
    $region18: #{tpu_custom_call.1} parent=1 // pred_check
      _
    $region19: #{tpu_custom_call.1} parent=1 // pred_check_branch
      %2215 = sbr.rel (0) target = $region21
    $region20: #{tpu_custom_call.1} parent=1 // pred_region
      %s2217 = ssub.s32 1024, 1024
      %2218 = vsyncadd [#allocation4], %s2217
      %s2220 = sshll.u32 [#allocation5], 4
      %s2221 = int_to_ptr.vmem [resolvable:$true] %s2220
      %2223 = dma.vmem_to_hbm [thread:$0]  %s2221, 1024, %s3, [#allocation4]
    $region21: #{tpu_custom_call.1} parent=1 // pred_fallthru
      _
    // Predicated region
    $region22: #{tpu_custom_call.1} parent=1 // pred_check
      _
    $region23: #{tpu_custom_call.1} parent=1 // pred_check_branch
      %2225 = sbr.rel (0) target = $region25
    $region24: #{tpu_custom_call.1} parent=1 // pred_region
      %2226 = dma.done [#allocation4], 1024
    $region25: #{tpu_custom_call.1} parent=1 // pred_fallthru
      _
    %2227 = vsyncpa [#allocation3], 1
    %2228 = vsyncpa [#allocation4], 1

</llo_original>
